<compile_context>
chip_gen: v7x
topology: tpu7x:2x2x1
jax: 0.10.0
libtpu: 0.0.40
codegen_flags: <defaults>
</compile_context>

<pallas_src>
import functools
import re

import jax
import jax.numpy as jnp
from jax import lax
from jax.experimental import pallas as pl
from jax.experimental.pallas import tpu as pltpu

LANES = 128
CHUNK = 16     # rows per in-kernel chunk: 2 f32 vregs / 1 packed bf16 vreg

# TODO(synk): the laenge ChenSundman activation class source was not provided;
# the Chen-Sundman Einstein-model Gibbs form with pure-Fe-like constants is
# used here for the forward (gibbs) path.
_R = 8.31446261815324
_E0 = -8216.07
_THETA_E = 309.0
_A = 1.55e-3
_B = 3.2e-14


def _ceil_div(a, b):
    return -(-a // b)


def _round_up(a, m):
    return _ceil_div(a, m) * m


def _tpu_generation():
    """Best-effort TPU generation from device_kind (0 if unknown)."""
    try:
        kind = jax.devices()[0].device_kind
    except Exception:
        return 0
    m = re.search(r"(\d+)", kind)
    return int(m.group(1)) if m else 0


# ----------------------------------------------------------------------------
# Pallas kernel.  flag_ref: (1,) i32 SMEM (1 => softplus asymptote holds for
# the whole batch).  p_ref is the packed-parameter SMEM vector:
#   [0]=w11 [1]=b11
#   [2]=(E0+1.5*R*THETA_E)*w21 + b21 + b22   (c0)
#   [3]=3*R*w21 (c1)  [4]=-0.5*A*w21 (c2)  [5]=-(B/20)*w21 (c3)
#   [8:8+H]=w12  [8+H:8+2H]=b12  [8+2H:8+3H]=w22        (H <= 18)
def _laenge_kernel(hidden_dim, chunk, use_bf16, flag_ref, p_ref, x_ref, o_ref):
    H = hidden_dim
    block_rows = x_ref.shape[0]
    assert block_rows % chunk == 0
    nchunks = block_rows // chunk

    # --- read every packed scalar once (SMEM -> sregs), before any loop -----
    w11 = p_ref[0]
    b11 = p_ref[1]
    c0 = p_ref[2]
    c1 = p_ref[3]
    c2 = p_ref[4]
    c3 = p_ref[5]
    w12 = [p_ref[8 + h] for h in range(H)]
    b12 = [p_ref[8 + H + h] for h in range(H)]
    w22 = [p_ref[8 + 2 * H + h] for h in range(H)]

    if nchunks % 8 == 0:
        unroll = 8
    elif nchunks % 4 == 0:
        unroll = 4
    elif nchunks % 2 == 0:
        unroll = 2
    else:
        unroll = 1

    def make_chunk_body(asymptotic):
        def chunk_body(c, carry):
            r0 = pl.multiple_of(c * chunk, chunk)
            x = x_ref[pl.ds(r0, chunk), :]              # (chunk, 128) f32

            # ---- sub_net_1: ChenSundman Gibbs, w21/b21/b22 pre-folded ------
            s1 = x * w11 + b11
            inv_s1 = pl.reciprocal(s1)                  # exact (review note)
            s1_sq = s1 * s1
            log_term = jnp.log(1.0 - jnp.exp((-_THETA_E) * inv_s1))
            acc = (c0
                   + c1 * (s1 * log_term)
                   + c2 * s1_sq
                   + c3 * (s1_sq * s1_sq * s1))

            # ---- sub_net_2: Linear(1,H) -> Softplus -> Linear(H,1) ---------
            for h in range(H):
                s2 = x * w12[h] + b12[h]
                relu = jnp.maximum(s2, 0.0)
                if asymptotic:
                    # |s2| >= 20 over the whole batch: softplus == relu in f32
                    acc = acc + relu * w22[h]
                else:
                    t = jnp.minimum(s2, -s2)            # == -|s2|, one VALU op
                    if use_bf16:
                        # bf16 exp/log: halves the dominant EUP cost (v6e/v7x);
                        # log term <= ln2 so bf16 error is far inside tolerance
                        e = jnp.exp(t.astype(jnp.bfloat16))
                        tail = jnp.log(1.0 + e).astype(jnp.float32)
                    else:
                        tail = jnp.log(1.0 + jnp.exp(t))
                    acc = acc + (relu + tail) * w22[h]

            o_ref[pl.ds(r0, chunk), :] = acc
            return carry
        return chunk_body

    @pl.when(flag_ref[0] != 0)
    def _():
        lax.fori_loop(0, nchunks, make_chunk_body(True), 0, unroll=unroll)

    @pl.when(flag_ref[0] == 0)
    def _():
        lax.fori_loop(0, nchunks, make_chunk_body(False), 0, unroll=unroll)


# ----------------------------------------------------------------------------
def pack_params(params, hidden_dim):
    """Pack all parameters (with sub_net_1 output layer folded) into (64,) f32."""
    H = hidden_dim
    assert 8 + 3 * H <= 64, "packed-parameter layout supports H <= 18"
    f32 = lambda v: jnp.asarray(v, jnp.float32)
    w11 = f32(params["w11"]).reshape(())
    b11 = f32(params["b11"]).reshape(())
    w21 = f32(params["w21"]).reshape(())
    b21 = f32(params["b21"]).reshape(())
    b22 = f32(params["b22"]).reshape(())

    vec = jnp.zeros((64,), jnp.float32)
    vec = vec.at[0].set(w11)
    vec = vec.at[1].set(b11)
    # ChenSundman constants with w21 and both output biases folded in.
    vec = vec.at[2].set((_E0 + 1.5 * _R * _THETA_E) * w21 + b21 + b22)
    vec = vec.at[3].set(3.0 * _R * w21)
    vec = vec.at[4].set(-0.5 * _A * w21)
    vec = vec.at[5].set(-(_B / 20.0) * w21)
    vec = vec.at[8:8 + H].set(f32(params["w12"]).reshape(-1))
    vec = vec.at[8 + H:8 + 2 * H].set(f32(params["b12"]).reshape(-1))
    vec = vec.at[8 + 2 * H:8 + 3 * H].set(f32(params["w22"]).reshape(-1))
    return vec


def laenge_forward(x, params, *, block_rows=1024):
    """x: (B, 1) temperatures -> (B, 1) f32 Gibbs energy."""
    B = x.shape[0]
    H = params["w12"].shape[1]
    x_flat = x.reshape(-1).astype(jnp.float32)

    gen = _tpu_generation()
    use_bf16 = gen >= 6    # v6e/v7x: bf16-native EUP/VPU; v5e and older: f32 only
    multi_tc = gen >= 7    # v7x: 2 TensorCores/chip -> force even block count

    block_rows = max(CHUNK, (block_rows // CHUNK) * CHUNK)
    rows = max(1, _ceil_div(B, LANES))
    if multi_tc and rows >= 16:
        nb = max(2, 2 * _ceil_div(rows, 2 * block_rows))   # even #blocks, balanced
        br = _round_up(_ceil_div(rows, nb), CHUNK)
    else:
        # single TensorCore: no forced split (it only adds grid-step overhead)
        br = min(block_rows, _round_up(rows, CHUNK))
        nb = _ceil_div(rows, br)
    rows_padded = nb * br
    pad = rows_padded * LANES - B

    # Edge-pad (replicate last real temperature) so pad lanes stay inside the
    # ChenSundman domain regardless of parameter signs; they are sliced away.
    x2 = jnp.pad(x_flat, (0, pad), mode="edge").reshape(rows_padded, LANES)

    p_vec = pack_params(params, H)

    # Kernel-uniform softplus-asymptote guard: lower bound on |s2_h| over the
    # whole batch from the affine map s2 = x*w12 + b12 evaluated at min/max(x).
    w12 = jnp.asarray(params["w12"], jnp.float32).reshape(-1)
    b12 = jnp.asarray(params["b12"], jnp.float32).reshape(-1)
    x_min = jnp.min(x_flat)
    x_max = jnp.max(x_flat)
    s_lo = x_min * w12 + b12
    s_hi = x_max * w12 + b12
    per_h = jnp.where(s_lo * s_hi > 0.0,
                      jnp.minimum(jnp.abs(s_lo), jnp.abs(s_hi)),
                      0.0)
    asym_flag = (jnp.min(per_h) >= 20.0).astype(jnp.int32).reshape(1)

    out2 = pl.pallas_call(
        functools.partial(_laenge_kernel, H, CHUNK, use_bf16),
        out_shape=jax.ShapeDtypeStruct((rows_padded, LANES), jnp.float32),
        grid=(nb,),
        in_specs=[
            pl.BlockSpec(memory_space=pltpu.MemorySpace.SMEM),   # asymptote flag
            pl.BlockSpec(memory_space=pltpu.MemorySpace.SMEM),   # packed params
            pl.BlockSpec((br, LANES), lambda i: (i, 0)),         # x tile
        ],
        out_specs=pl.BlockSpec((br, LANES), lambda i: (i, 0)),
        compiler_params=pltpu.CompilerParams(
            dimension_semantics=("parallel",),
            vmem_limit_bytes=32 * 1024 * 1024,   # fits v7x's smaller VMEM
        ),
    )(asym_flag, p_vec, x2)

    return out2.reshape(-1)[:B].reshape(B, 1)


# ----------------------------------------------------------------------------
# Deterministic parameter init (shapes as in LaengeNet.__init__, hidden_dim_2=16).
# NOTE: the module's default init is uniform_(-0.2, -0.1); we use uniform(0.1,
# 0.2) (sign-flipped) so the ChenSundman log-domain (s > 0) is valid for
# positive temperatures.  Outputs therefore match the architecture, not the
# original (NaN-producing for T>0) default parameterization.
def init_params(key, hidden_dim_2=16):
    ks = jax.random.split(key, 8)
    u = lambda k, shape: jax.random.uniform(k, shape, jnp.float32, 0.1, 0.2)
    return dict(
        # sub_net_1: Linear(1,1) / Linear(1,1)
        w11=u(ks[0], (1, 1)), b11=u(ks[1], (1, 1)),
        w21=u(ks[2], (1, 1)), b21=u(ks[3], (1, 1)),
        # sub_net_2: Linear(1,H) weight stored transposed as (1,H) / Linear(H,1)
        w12=u(ks[4], (1, hidden_dim_2)), b12=u(ks[5], (1, hidden_dim_2)),
        w22=u(ks[6], (1, hidden_dim_2)), b22=u(ks[7], (1, 1)),
    )


# ----------------------------------------------------------------------------
# Pure-JAX reference (exact division / stable softplus, un-folded constants).
def _chen_sundman_ref(s):
    return (_E0
            + 1.5 * _R * _THETA_E
            + 3.0 * _R * s * jnp.log(1.0 - jnp.exp(-_THETA_E / s))
            - 0.5 * _A * s * s
            - (_B / 20.0) * (s ** 5))


def _softplus_ref(s):
    return jnp.maximum(s, 0.0) + jnp.log1p(jnp.exp(-jnp.abs(s)))


def laenge_reference(x, p):
    x = x.astype(jnp.float32)
    s1 = x * p["w11"] + p["b11"]
    g1 = _chen_sundman_ref(s1) * p["w21"] + p["b21"]
    s2 = x * p["w12"] + p["b12"]
    g2 = jnp.sum(_softplus_ref(s2) * p["w22"], axis=-1, keepdims=True) + p["b22"]
    return g1 + g2


if __name__ == "__main__":
    key = jax.random.PRNGKey(0)
    k_param, k_x1, k_x2, k_x3 = jax.random.split(key, 4)

    params = init_params(k_param, hidden_dim_2=16)

    cases = (
        # Kelvin-range temperatures: softplus asymptote branch (no softplus EUP)
        ("small_asymptotic", 8, 300.0, 2000.0, 1024, k_x1),
        # multi-block grid path (block_rows=16 -> >= 2 grid steps) + lane padding
        ("multiblock_asymptotic", 3000, 300.0, 2000.0, 16, k_x2),
        # low-temperature range: exercises the full exp/log softplus branch
        # (bf16 tail on v6e/v7x, f32 on v5e)
        ("softplus_tail", 513, 10.0, 100.0, 1024, k_x3),
    )
    for name, B, lo, hi, brows, kx in cases:
        x = jax.random.uniform(kx, (B, 1), jnp.float32, minval=lo, maxval=hi)
        out = jax.block_until_ready(laenge_forward(x, params, block_rows=brows))
        ref = laenge_reference(x, params)
        assert out.shape == (B, 1) and out.dtype == jnp.float32, name
        assert bool(jnp.all(jnp.isfinite(out))), name
        assert jnp.allclose(out, ref, rtol=5e-3, atol=5.0), (
            name, float(jnp.max(jnp.abs(out - ref))))

    print("KERNEL_OK")
</pallas_src>

<mosaic_0001>
module attributes {stable_mosaic.version = 11 : i64} {
  func.func @_laenge_kernel(%arg0: i32, %arg1: memref<1xi32, #tpu.memory_space<smem>>, %arg2: memref<64xf32, #tpu.memory_space<smem>>, %arg3: memref<16x128xf32, #tpu.memory_space<vmem>>, %arg4: memref<16x128xf32, #tpu.memory_space<vmem>>) attributes {dimension_semantics = [#tpu.dimension_semantics<parallel>], iteration_bounds = array<i64: 1>, scalar_prefetch = 0 : i64, scratch_operands = 0 : i64, tpu.core_type = #tpu.core_type<tc>, window_params = [{transform_indices = @transform_0, window_bounds = array<i64: 1>}, {transform_indices = @transform_1, window_bounds = array<i64: 64>}, {transform_indices = @transform_2, window_bounds = array<i64: 16, 128>}, {transform_indices = @transform_3, window_bounds = array<i64: 16, 128>}]} {
    %c0 = arith.constant 0 : index
    %0 = memref.load %arg2[%c0] : memref<64xf32, #tpu.memory_space<smem>>
    %c1 = arith.constant 1 : index
    %1 = memref.load %arg2[%c1] : memref<64xf32, #tpu.memory_space<smem>>
    %c2 = arith.constant 2 : index
    %2 = memref.load %arg2[%c2] : memref<64xf32, #tpu.memory_space<smem>>
    %c3 = arith.constant 3 : index
    %3 = memref.load %arg2[%c3] : memref<64xf32, #tpu.memory_space<smem>>
    %c4 = arith.constant 4 : index
    %4 = memref.load %arg2[%c4] : memref<64xf32, #tpu.memory_space<smem>>
    %c5 = arith.constant 5 : index
    %5 = memref.load %arg2[%c5] : memref<64xf32, #tpu.memory_space<smem>>
    %c8 = arith.constant 8 : index
    %6 = memref.load %arg2[%c8] : memref<64xf32, #tpu.memory_space<smem>>
    %c9 = arith.constant 9 : index
    %7 = memref.load %arg2[%c9] : memref<64xf32, #tpu.memory_space<smem>>
    %c10 = arith.constant 10 : index
    %8 = memref.load %arg2[%c10] : memref<64xf32, #tpu.memory_space<smem>>
    %c11 = arith.constant 11 : index
    %9 = memref.load %arg2[%c11] : memref<64xf32, #tpu.memory_space<smem>>
    %c12 = arith.constant 12 : index
    %10 = memref.load %arg2[%c12] : memref<64xf32, #tpu.memory_space<smem>>
    %c13 = arith.constant 13 : index
    %11 = memref.load %arg2[%c13] : memref<64xf32, #tpu.memory_space<smem>>
    %c14 = arith.constant 14 : index
    %12 = memref.load %arg2[%c14] : memref<64xf32, #tpu.memory_space<smem>>
    %c15 = arith.constant 15 : index
    %13 = memref.load %arg2[%c15] : memref<64xf32, #tpu.memory_space<smem>>
    %c16 = arith.constant 16 : index
    %14 = memref.load %arg2[%c16] : memref<64xf32, #tpu.memory_space<smem>>
    %c17 = arith.constant 17 : index
    %15 = memref.load %arg2[%c17] : memref<64xf32, #tpu.memory_space<smem>>
    %c18 = arith.constant 18 : index
    %16 = memref.load %arg2[%c18] : memref<64xf32, #tpu.memory_space<smem>>
    %c19 = arith.constant 19 : index
    %17 = memref.load %arg2[%c19] : memref<64xf32, #tpu.memory_space<smem>>
    %c20 = arith.constant 20 : index
    %18 = memref.load %arg2[%c20] : memref<64xf32, #tpu.memory_space<smem>>
    %c21 = arith.constant 21 : index
    %19 = memref.load %arg2[%c21] : memref<64xf32, #tpu.memory_space<smem>>
    %c22 = arith.constant 22 : index
    %20 = memref.load %arg2[%c22] : memref<64xf32, #tpu.memory_space<smem>>
    %c23 = arith.constant 23 : index
    %21 = memref.load %arg2[%c23] : memref<64xf32, #tpu.memory_space<smem>>
    %c24 = arith.constant 24 : index
    %22 = memref.load %arg2[%c24] : memref<64xf32, #tpu.memory_space<smem>>
    %c25 = arith.constant 25 : index
    %23 = memref.load %arg2[%c25] : memref<64xf32, #tpu.memory_space<smem>>
    %c26 = arith.constant 26 : index
    %24 = memref.load %arg2[%c26] : memref<64xf32, #tpu.memory_space<smem>>
    %c27 = arith.constant 27 : index
    %25 = memref.load %arg2[%c27] : memref<64xf32, #tpu.memory_space<smem>>
    %c28 = arith.constant 28 : index
    %26 = memref.load %arg2[%c28] : memref<64xf32, #tpu.memory_space<smem>>
    %c29 = arith.constant 29 : index
    %27 = memref.load %arg2[%c29] : memref<64xf32, #tpu.memory_space<smem>>
    %c30 = arith.constant 30 : index
    %28 = memref.load %arg2[%c30] : memref<64xf32, #tpu.memory_space<smem>>
    %c31 = arith.constant 31 : index
    %29 = memref.load %arg2[%c31] : memref<64xf32, #tpu.memory_space<smem>>
    %c32 = arith.constant 32 : index
    %30 = memref.load %arg2[%c32] : memref<64xf32, #tpu.memory_space<smem>>
    %c33 = arith.constant 33 : index
    %31 = memref.load %arg2[%c33] : memref<64xf32, #tpu.memory_space<smem>>
    %c34 = arith.constant 34 : index
    %32 = memref.load %arg2[%c34] : memref<64xf32, #tpu.memory_space<smem>>
    %c35 = arith.constant 35 : index
    %33 = memref.load %arg2[%c35] : memref<64xf32, #tpu.memory_space<smem>>
    %c36 = arith.constant 36 : index
    %34 = memref.load %arg2[%c36] : memref<64xf32, #tpu.memory_space<smem>>
    %c37 = arith.constant 37 : index
    %35 = memref.load %arg2[%c37] : memref<64xf32, #tpu.memory_space<smem>>
    %c38 = arith.constant 38 : index
    %36 = memref.load %arg2[%c38] : memref<64xf32, #tpu.memory_space<smem>>
    %c39 = arith.constant 39 : index
    %37 = memref.load %arg2[%c39] : memref<64xf32, #tpu.memory_space<smem>>
    %c40 = arith.constant 40 : index
    %38 = memref.load %arg2[%c40] : memref<64xf32, #tpu.memory_space<smem>>
    %c41 = arith.constant 41 : index
    %39 = memref.load %arg2[%c41] : memref<64xf32, #tpu.memory_space<smem>>
    %c42 = arith.constant 42 : index
    %40 = memref.load %arg2[%c42] : memref<64xf32, #tpu.memory_space<smem>>
    %c43 = arith.constant 43 : index
    %41 = memref.load %arg2[%c43] : memref<64xf32, #tpu.memory_space<smem>>
    %c44 = arith.constant 44 : index
    %42 = memref.load %arg2[%c44] : memref<64xf32, #tpu.memory_space<smem>>
    %c45 = arith.constant 45 : index
    %43 = memref.load %arg2[%c45] : memref<64xf32, #tpu.memory_space<smem>>
    %c46 = arith.constant 46 : index
    %44 = memref.load %arg2[%c46] : memref<64xf32, #tpu.memory_space<smem>>
    %c47 = arith.constant 47 : index
    %45 = memref.load %arg2[%c47] : memref<64xf32, #tpu.memory_space<smem>>
    %c48 = arith.constant 48 : index
    %46 = memref.load %arg2[%c48] : memref<64xf32, #tpu.memory_space<smem>>
    %c49 = arith.constant 49 : index
    %47 = memref.load %arg2[%c49] : memref<64xf32, #tpu.memory_space<smem>>
    %c50 = arith.constant 50 : index
    %48 = memref.load %arg2[%c50] : memref<64xf32, #tpu.memory_space<smem>>
    %c51 = arith.constant 51 : index
    %49 = memref.load %arg2[%c51] : memref<64xf32, #tpu.memory_space<smem>>
    %c52 = arith.constant 52 : index
    %50 = memref.load %arg2[%c52] : memref<64xf32, #tpu.memory_space<smem>>
    %c53 = arith.constant 53 : index
    %51 = memref.load %arg2[%c53] : memref<64xf32, #tpu.memory_space<smem>>
    %c54 = arith.constant 54 : index
    %52 = memref.load %arg2[%c54] : memref<64xf32, #tpu.memory_space<smem>>
    %c55 = arith.constant 55 : index
    %53 = memref.load %arg2[%c55] : memref<64xf32, #tpu.memory_space<smem>>
    %c0_0 = arith.constant 0 : index
    %54 = memref.load %arg1[%c0_0] : memref<1xi32, #tpu.memory_space<smem>>
    %c0_i32 = arith.constant 0 : i32
    %55 = arith.cmpi ne, %54, %c0_i32 : i32
    %56 = arith.extui %55 : i1 to i32
    %c0_i32_1 = arith.constant 0 : i32
    %57 = arith.cmpi ne, %56, %c0_i32_1 : i32
    scf.if %57 {
      %c0_i32_5 = arith.constant 0 : i32
      %c16_i32 = arith.constant 16 : i32
      %62 = arith.muli %c0_i32_5, %c16_i32 : i32
      %63 = tpu.assume_multiple %62, 16 : i32
      %64 = arith.index_cast %63 : i32 to index
      %c0_6 = arith.constant 0 : index
      %65 = vector.load %arg3[%64, %c0_6] : memref<16x128xf32, #tpu.memory_space<vmem>>, vector<16x128xf32>
      %66 = vector.broadcast %0 : f32 to vector<16x128xf32>
      %67 = arith.mulf %65, %66 : vector<16x128xf32>
      %68 = vector.broadcast %1 : f32 to vector<16x128xf32>
      %69 = arith.addf %67, %68 : vector<16x128xf32>
      %70 = tpu.reciprocal %69 : vector<16x128xf32> -> vector<16x128xf32>
      %71 = arith.mulf %69, %69 : vector<16x128xf32>
      %cst = arith.constant -3.090000e+02 : f32
      %72 = vector.broadcast %cst : f32 to vector<16x128xf32>
      %73 = arith.mulf %72, %70 : vector<16x128xf32>
      %74 = math.exp %73 : vector<16x128xf32>
      %cst_7 = arith.constant 1.000000e+00 : f32
      %75 = vector.broadcast %cst_7 : f32 to vector<16x128xf32>
      %76 = arith.subf %75, %74 : vector<16x128xf32>
      %77 = math.log %76 : vector<16x128xf32>
      %78 = arith.mulf %69, %77 : vector<16x128xf32>
      %79 = vector.broadcast %3 : f32 to vector<16x128xf32>
      %80 = arith.mulf %79, %78 : vector<16x128xf32>
      %81 = vector.broadcast %2 : f32 to vector<16x128xf32>
      %82 = arith.addf %81, %80 : vector<16x128xf32>
      %83 = vector.broadcast %4 : f32 to vector<16x128xf32>
      %84 = arith.mulf %83, %71 : vector<16x128xf32>
      %85 = arith.addf %82, %84 : vector<16x128xf32>
      %86 = arith.mulf %71, %71 : vector<16x128xf32>
      %87 = arith.mulf %86, %69 : vector<16x128xf32>
      %88 = vector.broadcast %5 : f32 to vector<16x128xf32>
      %89 = arith.mulf %88, %87 : vector<16x128xf32>
      %90 = arith.addf %85, %89 : vector<16x128xf32>
      %91 = vector.broadcast %6 : f32 to vector<16x128xf32>
      %92 = arith.mulf %65, %91 : vector<16x128xf32>
      %93 = vector.broadcast %22 : f32 to vector<16x128xf32>
      %94 = arith.addf %92, %93 : vector<16x128xf32>
      %cst_8 = arith.constant 0.000000e+00 : f32
      %95 = vector.broadcast %cst_8 : f32 to vector<16x128xf32>
      %96 = arith.maximumf %94, %95 : vector<16x128xf32>
      %97 = vector.broadcast %38 : f32 to vector<16x128xf32>
      %98 = arith.mulf %96, %97 : vector<16x128xf32>
      %99 = arith.addf %90, %98 : vector<16x128xf32>
      %100 = vector.broadcast %7 : f32 to vector<16x128xf32>
      %101 = arith.mulf %65, %100 : vector<16x128xf32>
      %102 = vector.broadcast %23 : f32 to vector<16x128xf32>
      %103 = arith.addf %101, %102 : vector<16x128xf32>
      %cst_9 = arith.constant 0.000000e+00 : f32
      %104 = vector.broadcast %cst_9 : f32 to vector<16x128xf32>
      %105 = arith.maximumf %103, %104 : vector<16x128xf32>
      %106 = vector.broadcast %39 : f32 to vector<16x128xf32>
      %107 = arith.mulf %105, %106 : vector<16x128xf32>
      %108 = arith.addf %99, %107 : vector<16x128xf32>
      %109 = vector.broadcast %8 : f32 to vector<16x128xf32>
      %110 = arith.mulf %65, %109 : vector<16x128xf32>
      %111 = vector.broadcast %24 : f32 to vector<16x128xf32>
      %112 = arith.addf %110, %111 : vector<16x128xf32>
      %cst_10 = arith.constant 0.000000e+00 : f32
      %113 = vector.broadcast %cst_10 : f32 to vector<16x128xf32>
      %114 = arith.maximumf %112, %113 : vector<16x128xf32>
      %115 = vector.broadcast %40 : f32 to vector<16x128xf32>
      %116 = arith.mulf %114, %115 : vector<16x128xf32>
      %117 = arith.addf %108, %116 : vector<16x128xf32>
      %118 = vector.broadcast %9 : f32 to vector<16x128xf32>
      %119 = arith.mulf %65, %118 : vector<16x128xf32>
      %120 = vector.broadcast %25 : f32 to vector<16x128xf32>
      %121 = arith.addf %119, %120 : vector<16x128xf32>
      %cst_11 = arith.constant 0.000000e+00 : f32
      %122 = vector.broadcast %cst_11 : f32 to vector<16x128xf32>
      %123 = arith.maximumf %121, %122 : vector<16x128xf32>
      %124 = vector.broadcast %41 : f32 to vector<16x128xf32>
      %125 = arith.mulf %123, %124 : vector<16x128xf32>
      %126 = arith.addf %117, %125 : vector<16x128xf32>
      %127 = vector.broadcast %10 : f32 to vector<16x128xf32>
      %128 = arith.mulf %65, %127 : vector<16x128xf32>
      %129 = vector.broadcast %26 : f32 to vector<16x128xf32>
      %130 = arith.addf %128, %129 : vector<16x128xf32>
      %cst_12 = arith.constant 0.000000e+00 : f32
      %131 = vector.broadcast %cst_12 : f32 to vector<16x128xf32>
      %132 = arith.maximumf %130, %131 : vector<16x128xf32>
      %133 = vector.broadcast %42 : f32 to vector<16x128xf32>
      %134 = arith.mulf %132, %133 : vector<16x128xf32>
      %135 = arith.addf %126, %134 : vector<16x128xf32>
      %136 = vector.broadcast %11 : f32 to vector<16x128xf32>
      %137 = arith.mulf %65, %136 : vector<16x128xf32>
      %138 = vector.broadcast %27 : f32 to vector<16x128xf32>
      %139 = arith.addf %137, %138 : vector<16x128xf32>
      %cst_13 = arith.constant 0.000000e+00 : f32
      %140 = vector.broadcast %cst_13 : f32 to vector<16x128xf32>
      %141 = arith.maximumf %139, %140 : vector<16x128xf32>
      %142 = vector.broadcast %43 : f32 to vector<16x128xf32>
      %143 = arith.mulf %141, %142 : vector<16x128xf32>
      %144 = arith.addf %135, %143 : vector<16x128xf32>
      %145 = vector.broadcast %12 : f32 to vector<16x128xf32>
      %146 = arith.mulf %65, %145 : vector<16x128xf32>
      %147 = vector.broadcast %28 : f32 to vector<16x128xf32>
      %148 = arith.addf %146, %147 : vector<16x128xf32>
      %cst_14 = arith.constant 0.000000e+00 : f32
      %149 = vector.broadcast %cst_14 : f32 to vector<16x128xf32>
      %150 = arith.maximumf %148, %149 : vector<16x128xf32>
      %151 = vector.broadcast %44 : f32 to vector<16x128xf32>
      %152 = arith.mulf %150, %151 : vector<16x128xf32>
      %153 = arith.addf %144, %152 : vector<16x128xf32>
      %154 = vector.broadcast %13 : f32 to vector<16x128xf32>
      %155 = arith.mulf %65, %154 : vector<16x128xf32>
      %156 = vector.broadcast %29 : f32 to vector<16x128xf32>
      %157 = arith.addf %155, %156 : vector<16x128xf32>
      %cst_15 = arith.constant 0.000000e+00 : f32
      %158 = vector.broadcast %cst_15 : f32 to vector<16x128xf32>
      %159 = arith.maximumf %157, %158 : vector<16x128xf32>
      %160 = vector.broadcast %45 : f32 to vector<16x128xf32>
      %161 = arith.mulf %159, %160 : vector<16x128xf32>
      %162 = arith.addf %153, %161 : vector<16x128xf32>
      %163 = vector.broadcast %14 : f32 to vector<16x128xf32>
      %164 = arith.mulf %65, %163 : vector<16x128xf32>
      %165 = vector.broadcast %30 : f32 to vector<16x128xf32>
      %166 = arith.addf %164, %165 : vector<16x128xf32>
      %cst_16 = arith.constant 0.000000e+00 : f32
      %167 = vector.broadcast %cst_16 : f32 to vector<16x128xf32>
      %168 = arith.maximumf %166, %167 : vector<16x128xf32>
      %169 = vector.broadcast %46 : f32 to vector<16x128xf32>
      %170 = arith.mulf %168, %169 : vector<16x128xf32>
      %171 = arith.addf %162, %170 : vector<16x128xf32>
      %172 = vector.broadcast %15 : f32 to vector<16x128xf32>
      %173 = arith.mulf %65, %172 : vector<16x128xf32>
      %174 = vector.broadcast %31 : f32 to vector<16x128xf32>
      %175 = arith.addf %173, %174 : vector<16x128xf32>
      %cst_17 = arith.constant 0.000000e+00 : f32
      %176 = vector.broadcast %cst_17 : f32 to vector<16x128xf32>
      %177 = arith.maximumf %175, %176 : vector<16x128xf32>
      %178 = vector.broadcast %47 : f32 to vector<16x128xf32>
      %179 = arith.mulf %177, %178 : vector<16x128xf32>
      %180 = arith.addf %171, %179 : vector<16x128xf32>
      %181 = vector.broadcast %16 : f32 to vector<16x128xf32>
      %182 = arith.mulf %65, %181 : vector<16x128xf32>
      %183 = vector.broadcast %32 : f32 to vector<16x128xf32>
      %184 = arith.addf %182, %183 : vector<16x128xf32>
      %cst_18 = arith.constant 0.000000e+00 : f32
      %185 = vector.broadcast %cst_18 : f32 to vector<16x128xf32>
      %186 = arith.maximumf %184, %185 : vector<16x128xf32>
      %187 = vector.broadcast %48 : f32 to vector<16x128xf32>
      %188 = arith.mulf %186, %187 : vector<16x128xf32>
      %189 = arith.addf %180, %188 : vector<16x128xf32>
      %190 = vector.broadcast %17 : f32 to vector<16x128xf32>
      %191 = arith.mulf %65, %190 : vector<16x128xf32>
      %192 = vector.broadcast %33 : f32 to vector<16x128xf32>
      %193 = arith.addf %191, %192 : vector<16x128xf32>
      %cst_19 = arith.constant 0.000000e+00 : f32
      %194 = vector.broadcast %cst_19 : f32 to vector<16x128xf32>
      %195 = arith.maximumf %193, %194 : vector<16x128xf32>
      %196 = vector.broadcast %49 : f32 to vector<16x128xf32>
      %197 = arith.mulf %195, %196 : vector<16x128xf32>
      %198 = arith.addf %189, %197 : vector<16x128xf32>
      %199 = vector.broadcast %18 : f32 to vector<16x128xf32>
      %200 = arith.mulf %65, %199 : vector<16x128xf32>
      %201 = vector.broadcast %34 : f32 to vector<16x128xf32>
      %202 = arith.addf %200, %201 : vector<16x128xf32>
      %cst_20 = arith.constant 0.000000e+00 : f32
      %203 = vector.broadcast %cst_20 : f32 to vector<16x128xf32>
      %204 = arith.maximumf %202, %203 : vector<16x128xf32>
      %205 = vector.broadcast %50 : f32 to vector<16x128xf32>
      %206 = arith.mulf %204, %205 : vector<16x128xf32>
      %207 = arith.addf %198, %206 : vector<16x128xf32>
      %208 = vector.broadcast %19 : f32 to vector<16x128xf32>
      %209 = arith.mulf %65, %208 : vector<16x128xf32>
      %210 = vector.broadcast %35 : f32 to vector<16x128xf32>
      %211 = arith.addf %209, %210 : vector<16x128xf32>
      %cst_21 = arith.constant 0.000000e+00 : f32
      %212 = vector.broadcast %cst_21 : f32 to vector<16x128xf32>
      %213 = arith.maximumf %211, %212 : vector<16x128xf32>
      %214 = vector.broadcast %51 : f32 to vector<16x128xf32>
      %215 = arith.mulf %213, %214 : vector<16x128xf32>
      %216 = arith.addf %207, %215 : vector<16x128xf32>
      %217 = vector.broadcast %20 : f32 to vector<16x128xf32>
      %218 = arith.mulf %65, %217 : vector<16x128xf32>
      %219 = vector.broadcast %36 : f32 to vector<16x128xf32>
      %220 = arith.addf %218, %219 : vector<16x128xf32>
      %cst_22 = arith.constant 0.000000e+00 : f32
      %221 = vector.broadcast %cst_22 : f32 to vector<16x128xf32>
      %222 = arith.maximumf %220, %221 : vector<16x128xf32>
      %223 = vector.broadcast %52 : f32 to vector<16x128xf32>
      %224 = arith.mulf %222, %223 : vector<16x128xf32>
      %225 = arith.addf %216, %224 : vector<16x128xf32>
      %226 = vector.broadcast %21 : f32 to vector<16x128xf32>
      %227 = arith.mulf %65, %226 : vector<16x128xf32>
      %228 = vector.broadcast %37 : f32 to vector<16x128xf32>
      %229 = arith.addf %227, %228 : vector<16x128xf32>
      %cst_23 = arith.constant 0.000000e+00 : f32
      %230 = vector.broadcast %cst_23 : f32 to vector<16x128xf32>
      %231 = arith.maximumf %229, %230 : vector<16x128xf32>
      %232 = vector.broadcast %53 : f32 to vector<16x128xf32>
      %233 = arith.mulf %231, %232 : vector<16x128xf32>
      %234 = arith.addf %225, %233 : vector<16x128xf32>
      %235 = arith.index_cast %63 : i32 to index
      %c0_24 = arith.constant 0 : index
      %236 = vector.load %arg4[%235, %c0_24] : memref<16x128xf32, #tpu.memory_space<vmem>>, vector<16x128xf32>
      tpu.vector_store %arg4[%235, %c0_24], %234 {strides = array<i32>} : memref<16x128xf32, #tpu.memory_space<vmem>>, vector<16x128xf32>,
      %c1_i32 = arith.constant 1 : i32
    } else {
    }
    %c0_2 = arith.constant 0 : index
    %58 = memref.load %arg1[%c0_2] : memref<1xi32, #tpu.memory_space<smem>>
    %c0_i32_3 = arith.constant 0 : i32
    %59 = arith.cmpi eq, %58, %c0_i32_3 : i32
    %60 = arith.extui %59 : i1 to i32
    %c0_i32_4 = arith.constant 0 : i32
    %61 = arith.cmpi ne, %60, %c0_i32_4 : i32
    scf.if %61 {
      %c0_i32_5 = arith.constant 0 : i32
      %c16_i32 = arith.constant 16 : i32
      %62 = arith.muli %c0_i32_5, %c16_i32 : i32
      %63 = tpu.assume_multiple %62, 16 : i32
      %64 = arith.index_cast %63 : i32 to index
      %c0_6 = arith.constant 0 : index
      %65 = vector.load %arg3[%64, %c0_6] : memref<16x128xf32, #tpu.memory_space<vmem>>, vector<16x128xf32>
      %66 = vector.broadcast %0 : f32 to vector<16x128xf32>
      %67 = arith.mulf %65, %66 : vector<16x128xf32>
      %68 = vector.broadcast %1 : f32 to vector<16x128xf32>
      %69 = arith.addf %67, %68 : vector<16x128xf32>
      %70 = tpu.reciprocal %69 : vector<16x128xf32> -> vector<16x128xf32>
      %71 = arith.mulf %69, %69 : vector<16x128xf32>
      %cst = arith.constant -3.090000e+02 : f32
      %72 = vector.broadcast %cst : f32 to vector<16x128xf32>
      %73 = arith.mulf %72, %70 : vector<16x128xf32>
      %74 = math.exp %73 : vector<16x128xf32>
      %cst_7 = arith.constant 1.000000e+00 : f32
      %75 = vector.broadcast %cst_7 : f32 to vector<16x128xf32>
      %76 = arith.subf %75, %74 : vector<16x128xf32>
      %77 = math.log %76 : vector<16x128xf32>
      %78 = arith.mulf %69, %77 : vector<16x128xf32>
      %79 = vector.broadcast %3 : f32 to vector<16x128xf32>
      %80 = arith.mulf %79, %78 : vector<16x128xf32>
      %81 = vector.broadcast %2 : f32 to vector<16x128xf32>
      %82 = arith.addf %81, %80 : vector<16x128xf32>
      %83 = vector.broadcast %4 : f32 to vector<16x128xf32>
      %84 = arith.mulf %83, %71 : vector<16x128xf32>
      %85 = arith.addf %82, %84 : vector<16x128xf32>
      %86 = arith.mulf %71, %71 : vector<16x128xf32>
      %87 = arith.mulf %86, %69 : vector<16x128xf32>
      %88 = vector.broadcast %5 : f32 to vector<16x128xf32>
      %89 = arith.mulf %88, %87 : vector<16x128xf32>
      %90 = arith.addf %85, %89 : vector<16x128xf32>
      %91 = vector.broadcast %6 : f32 to vector<16x128xf32>
      %92 = arith.mulf %65, %91 : vector<16x128xf32>
      %93 = vector.broadcast %22 : f32 to vector<16x128xf32>
      %94 = arith.addf %92, %93 : vector<16x128xf32>
      %cst_8 = arith.constant 0.000000e+00 : f32
      %95 = vector.broadcast %cst_8 : f32 to vector<16x128xf32>
      %96 = arith.maximumf %94, %95 : vector<16x128xf32>
      %cst_9 = arith.constant 0.000000e+00 : f32
      %97 = vector.broadcast %cst_9 : f32 to vector<16x128xf32>
      %98 = arith.subf %97, %94 : vector<16x128xf32>
      %99 = arith.minimumf %94, %98 : vector<16x128xf32>
      %100 = math.exp %99 : vector<16x128xf32>
      %cst_10 = arith.constant 1.000000e+00 : f32
      %101 = vector.broadcast %cst_10 : f32 to vector<16x128xf32>
      %102 = arith.addf %101, %100 : vector<16x128xf32>
      %103 = math.log %102 : vector<16x128xf32>
      %104 = arith.addf %96, %103 : vector<16x128xf32>
      %105 = vector.broadcast %38 : f32 to vector<16x128xf32>
      %106 = arith.mulf %104, %105 : vector<16x128xf32>
      %107 = arith.addf %90, %106 : vector<16x128xf32>
      %108 = vector.broadcast %7 : f32 to vector<16x128xf32>
      %109 = arith.mulf %65, %108 : vector<16x128xf32>
      %110 = vector.broadcast %23 : f32 to vector<16x128xf32>
      %111 = arith.addf %109, %110 : vector<16x128xf32>
      %cst_11 = arith.constant 0.000000e+00 : f32
      %112 = vector.broadcast %cst_11 : f32 to vector<16x128xf32>
      %113 = arith.maximumf %111, %112 : vector<16x128xf32>
      %cst_12 = arith.constant 0.000000e+00 : f32
      %114 = vector.broadcast %cst_12 : f32 to vector<16x128xf32>
      %115 = arith.subf %114, %111 : vector<16x128xf32>
      %116 = arith.minimumf %111, %115 : vector<16x128xf32>
      %117 = math.exp %116 : vector<16x128xf32>
      %cst_13 = arith.constant 1.000000e+00 : f32
      %118 = vector.broadcast %cst_13 : f32 to vector<16x128xf32>
      %119 = arith.addf %118, %117 : vector<16x128xf32>
      %120 = math.log %119 : vector<16x128xf32>
      %121 = arith.addf %113, %120 : vector<16x128xf32>
      %122 = vector.broadcast %39 : f32 to vector<16x128xf32>
      %123 = arith.mulf %121, %122 : vector<16x128xf32>
      %124 = arith.addf %107, %123 : vector<16x128xf32>
      %125 = vector.broadcast %8 : f32 to vector<16x128xf32>
      %126 = arith.mulf %65, %125 : vector<16x128xf32>
      %127 = vector.broadcast %24 : f32 to vector<16x128xf32>
      %128 = arith.addf %126, %127 : vector<16x128xf32>
      %cst_14 = arith.constant 0.000000e+00 : f32
      %129 = vector.broadcast %cst_14 : f32 to vector<16x128xf32>
      %130 = arith.maximumf %128, %129 : vector<16x128xf32>
      %cst_15 = arith.constant 0.000000e+00 : f32
      %131 = vector.broadcast %cst_15 : f32 to vector<16x128xf32>
      %132 = arith.subf %131, %128 : vector<16x128xf32>
      %133 = arith.minimumf %128, %132 : vector<16x128xf32>
      %134 = math.exp %133 : vector<16x128xf32>
      %cst_16 = arith.constant 1.000000e+00 : f32
      %135 = vector.broadcast %cst_16 : f32 to vector<16x128xf32>
      %136 = arith.addf %135, %134 : vector<16x128xf32>
      %137 = math.log %136 : vector<16x128xf32>
      %138 = arith.addf %130, %137 : vector<16x128xf32>
      %139 = vector.broadcast %40 : f32 to vector<16x128xf32>
      %140 = arith.mulf %138, %139 : vector<16x128xf32>
      %141 = arith.addf %124, %140 : vector<16x128xf32>
      %142 = vector.broadcast %9 : f32 to vector<16x128xf32>
      %143 = arith.mulf %65, %142 : vector<16x128xf32>
      %144 = vector.broadcast %25 : f32 to vector<16x128xf32>
      %145 = arith.addf %143, %144 : vector<16x128xf32>
      %cst_17 = arith.constant 0.000000e+00 : f32
      %146 = vector.broadcast %cst_17 : f32 to vector<16x128xf32>
      %147 = arith.maximumf %145, %146 : vector<16x128xf32>
      %cst_18 = arith.constant 0.000000e+00 : f32
      %148 = vector.broadcast %cst_18 : f32 to vector<16x128xf32>
      %149 = arith.subf %148, %145 : vector<16x128xf32>
      %150 = arith.minimumf %145, %149 : vector<16x128xf32>
      %151 = math.exp %150 : vector<16x128xf32>
      %cst_19 = arith.constant 1.000000e+00 : f32
      %152 = vector.broadcast %cst_19 : f32 to vector<16x128xf32>
      %153 = arith.addf %152, %151 : vector<16x128xf32>
      %154 = math.log %153 : vector<16x128xf32>
      %155 = arith.addf %147, %154 : vector<16x128xf32>
      %156 = vector.broadcast %41 : f32 to vector<16x128xf32>
      %157 = arith.mulf %155, %156 : vector<16x128xf32>
      %158 = arith.addf %141, %157 : vector<16x128xf32>
      %159 = vector.broadcast %10 : f32 to vector<16x128xf32>
      %160 = arith.mulf %65, %159 : vector<16x128xf32>
      %161 = vector.broadcast %26 : f32 to vector<16x128xf32>
      %162 = arith.addf %160, %161 : vector<16x128xf32>
      %cst_20 = arith.constant 0.000000e+00 : f32
      %163 = vector.broadcast %cst_20 : f32 to vector<16x128xf32>
      %164 = arith.maximumf %162, %163 : vector<16x128xf32>
      %cst_21 = arith.constant 0.000000e+00 : f32
      %165 = vector.broadcast %cst_21 : f32 to vector<16x128xf32>
      %166 = arith.subf %165, %162 : vector<16x128xf32>
      %167 = arith.minimumf %162, %166 : vector<16x128xf32>
      %168 = math.exp %167 : vector<16x128xf32>
      %cst_22 = arith.constant 1.000000e+00 : f32
      %169 = vector.broadcast %cst_22 : f32 to vector<16x128xf32>
      %170 = arith.addf %169, %168 : vector<16x128xf32>
      %171 = math.log %170 : vector<16x128xf32>
      %172 = arith.addf %164, %171 : vector<16x128xf32>
      %173 = vector.broadcast %42 : f32 to vector<16x128xf32>
      %174 = arith.mulf %172, %173 : vector<16x128xf32>
      %175 = arith.addf %158, %174 : vector<16x128xf32>
      %176 = vector.broadcast %11 : f32 to vector<16x128xf32>
      %177 = arith.mulf %65, %176 : vector<16x128xf32>
      %178 = vector.broadcast %27 : f32 to vector<16x128xf32>
      %179 = arith.addf %177, %178 : vector<16x128xf32>
      %cst_23 = arith.constant 0.000000e+00 : f32
      %180 = vector.broadcast %cst_23 : f32 to vector<16x128xf32>
      %181 = arith.maximumf %179, %180 : vector<16x128xf32>
      %cst_24 = arith.constant 0.000000e+00 : f32
      %182 = vector.broadcast %cst_24 : f32 to vector<16x128xf32>
      %183 = arith.subf %182, %179 : vector<16x128xf32>
      %184 = arith.minimumf %179, %183 : vector<16x128xf32>
      %185 = math.exp %184 : vector<16x128xf32>
      %cst_25 = arith.constant 1.000000e+00 : f32
      %186 = vector.broadcast %cst_25 : f32 to vector<16x128xf32>
      %187 = arith.addf %186, %185 : vector<16x128xf32>
      %188 = math.log %187 : vector<16x128xf32>
      %189 = arith.addf %181, %188 : vector<16x128xf32>
      %190 = vector.broadcast %43 : f32 to vector<16x128xf32>
      %191 = arith.mulf %189, %190 : vector<16x128xf32>
      %192 = arith.addf %175, %191 : vector<16x128xf32>
      %193 = vector.broadcast %12 : f32 to vector<16x128xf32>
      %194 = arith.mulf %65, %193 : vector<16x128xf32>
      %195 = vector.broadcast %28 : f32 to vector<16x128xf32>
      %196 = arith.addf %194, %195 : vector<16x128xf32>
      %cst_26 = arith.constant 0.000000e+00 : f32
      %197 = vector.broadcast %cst_26 : f32 to vector<16x128xf32>
      %198 = arith.maximumf %196, %197 : vector<16x128xf32>
      %cst_27 = arith.constant 0.000000e+00 : f32
      %199 = vector.broadcast %cst_27 : f32 to vector<16x128xf32>
      %200 = arith.subf %199, %196 : vector<16x128xf32>
      %201 = arith.minimumf %196, %200 : vector<16x128xf32>
      %202 = math.exp %201 : vector<16x128xf32>
      %cst_28 = arith.constant 1.000000e+00 : f32
      %203 = vector.broadcast %cst_28 : f32 to vector<16x128xf32>
      %204 = arith.addf %203, %202 : vector<16x128xf32>
      %205 = math.log %204 : vector<16x128xf32>
      %206 = arith.addf %198, %205 : vector<16x128xf32>
      %207 = vector.broadcast %44 : f32 to vector<16x128xf32>
      %208 = arith.mulf %206, %207 : vector<16x128xf32>
      %209 = arith.addf %192, %208 : vector<16x128xf32>
      %210 = vector.broadcast %13 : f32 to vector<16x128xf32>
      %211 = arith.mulf %65, %210 : vector<16x128xf32>
      %212 = vector.broadcast %29 : f32 to vector<16x128xf32>
      %213 = arith.addf %211, %212 : vector<16x128xf32>
      %cst_29 = arith.constant 0.000000e+00 : f32
      %214 = vector.broadcast %cst_29 : f32 to vector<16x128xf32>
      %215 = arith.maximumf %213, %214 : vector<16x128xf32>
      %cst_30 = arith.constant 0.000000e+00 : f32
      %216 = vector.broadcast %cst_30 : f32 to vector<16x128xf32>
      %217 = arith.subf %216, %213 : vector<16x128xf32>
      %218 = arith.minimumf %213, %217 : vector<16x128xf32>
      %219 = math.exp %218 : vector<16x128xf32>
      %cst_31 = arith.constant 1.000000e+00 : f32
      %220 = vector.broadcast %cst_31 : f32 to vector<16x128xf32>
      %221 = arith.addf %220, %219 : vector<16x128xf32>
      %222 = math.log %221 : vector<16x128xf32>
      %223 = arith.addf %215, %222 : vector<16x128xf32>
      %224 = vector.broadcast %45 : f32 to vector<16x128xf32>
      %225 = arith.mulf %223, %224 : vector<16x128xf32>
      %226 = arith.addf %209, %225 : vector<16x128xf32>
      %227 = vector.broadcast %14 : f32 to vector<16x128xf32>
      %228 = arith.mulf %65, %227 : vector<16x128xf32>
      %229 = vector.broadcast %30 : f32 to vector<16x128xf32>
      %230 = arith.addf %228, %229 : vector<16x128xf32>
      %cst_32 = arith.constant 0.000000e+00 : f32
      %231 = vector.broadcast %cst_32 : f32 to vector<16x128xf32>
      %232 = arith.maximumf %230, %231 : vector<16x128xf32>
      %cst_33 = arith.constant 0.000000e+00 : f32
      %233 = vector.broadcast %cst_33 : f32 to vector<16x128xf32>
      %234 = arith.subf %233, %230 : vector<16x128xf32>
      %235 = arith.minimumf %230, %234 : vector<16x128xf32>
      %236 = math.exp %235 : vector<16x128xf32>
      %cst_34 = arith.constant 1.000000e+00 : f32
      %237 = vector.broadcast %cst_34 : f32 to vector<16x128xf32>
      %238 = arith.addf %237, %236 : vector<16x128xf32>
      %239 = math.log %238 : vector<16x128xf32>
      %240 = arith.addf %232, %239 : vector<16x128xf32>
      %241 = vector.broadcast %46 : f32 to vector<16x128xf32>
      %242 = arith.mulf %240, %241 : vector<16x128xf32>
      %243 = arith.addf %226, %242 : vector<16x128xf32>
      %244 = vector.broadcast %15 : f32 to vector<16x128xf32>
      %245 = arith.mulf %65, %244 : vector<16x128xf32>
      %246 = vector.broadcast %31 : f32 to vector<16x128xf32>
      %247 = arith.addf %245, %246 : vector<16x128xf32>
      %cst_35 = arith.constant 0.000000e+00 : f32
      %248 = vector.broadcast %cst_35 : f32 to vector<16x128xf32>
      %249 = arith.maximumf %247, %248 : vector<16x128xf32>
      %cst_36 = arith.constant 0.000000e+00 : f32
      %250 = vector.broadcast %cst_36 : f32 to vector<16x128xf32>
      %251 = arith.subf %250, %247 : vector<16x128xf32>
      %252 = arith.minimumf %247, %251 : vector<16x128xf32>
      %253 = math.exp %252 : vector<16x128xf32>
      %cst_37 = arith.constant 1.000000e+00 : f32
      %254 = vector.broadcast %cst_37 : f32 to vector<16x128xf32>
      %255 = arith.addf %254, %253 : vector<16x128xf32>
      %256 = math.log %255 : vector<16x128xf32>
      %257 = arith.addf %249, %256 : vector<16x128xf32>
      %258 = vector.broadcast %47 : f32 to vector<16x128xf32>
      %259 = arith.mulf %257, %258 : vector<16x128xf32>
      %260 = arith.addf %243, %259 : vector<16x128xf32>
      %261 = vector.broadcast %16 : f32 to vector<16x128xf32>
      %262 = arith.mulf %65, %261 : vector<16x128xf32>
      %263 = vector.broadcast %32 : f32 to vector<16x128xf32>
      %264 = arith.addf %262, %263 : vector<16x128xf32>
      %cst_38 = arith.constant 0.000000e+00 : f32
      %265 = vector.broadcast %cst_38 : f32 to vector<16x128xf32>
      %266 = arith.maximumf %264, %265 : vector<16x128xf32>
      %cst_39 = arith.constant 0.000000e+00 : f32
      %267 = vector.broadcast %cst_39 : f32 to vector<16x128xf32>
      %268 = arith.subf %267, %264 : vector<16x128xf32>
      %269 = arith.minimumf %264, %268 : vector<16x128xf32>
      %270 = math.exp %269 : vector<16x128xf32>
      %cst_40 = arith.constant 1.000000e+00 : f32
      %271 = vector.broadcast %cst_40 : f32 to vector<16x128xf32>
      %272 = arith.addf %271, %270 : vector<16x128xf32>
      %273 = math.log %272 : vector<16x128xf32>
      %274 = arith.addf %266, %273 : vector<16x128xf32>
      %275 = vector.broadcast %48 : f32 to vector<16x128xf32>
      %276 = arith.mulf %274, %275 : vector<16x128xf32>
      %277 = arith.addf %260, %276 : vector<16x128xf32>
      %278 = vector.broadcast %17 : f32 to vector<16x128xf32>
      %279 = arith.mulf %65, %278 : vector<16x128xf32>
      %280 = vector.broadcast %33 : f32 to vector<16x128xf32>
      %281 = arith.addf %279, %280 : vector<16x128xf32>
      %cst_41 = arith.constant 0.000000e+00 : f32
      %282 = vector.broadcast %cst_41 : f32 to vector<16x128xf32>
      %283 = arith.maximumf %281, %282 : vector<16x128xf32>
      %cst_42 = arith.constant 0.000000e+00 : f32
      %284 = vector.broadcast %cst_42 : f32 to vector<16x128xf32>
      %285 = arith.subf %284, %281 : vector<16x128xf32>
      %286 = arith.minimumf %281, %285 : vector<16x128xf32>
      %287 = math.exp %286 : vector<16x128xf32>
      %cst_43 = arith.constant 1.000000e+00 : f32
      %288 = vector.broadcast %cst_43 : f32 to vector<16x128xf32>
      %289 = arith.addf %288, %287 : vector<16x128xf32>
      %290 = math.log %289 : vector<16x128xf32>
      %291 = arith.addf %283, %290 : vector<16x128xf32>
      %292 = vector.broadcast %49 : f32 to vector<16x128xf32>
      %293 = arith.mulf %291, %292 : vector<16x128xf32>
      %294 = arith.addf %277, %293 : vector<16x128xf32>
      %295 = vector.broadcast %18 : f32 to vector<16x128xf32>
      %296 = arith.mulf %65, %295 : vector<16x128xf32>
      %297 = vector.broadcast %34 : f32 to vector<16x128xf32>
      %298 = arith.addf %296, %297 : vector<16x128xf32>
      %cst_44 = arith.constant 0.000000e+00 : f32
      %299 = vector.broadcast %cst_44 : f32 to vector<16x128xf32>
      %300 = arith.maximumf %298, %299 : vector<16x128xf32>
      %cst_45 = arith.constant 0.000000e+00 : f32
      %301 = vector.broadcast %cst_45 : f32 to vector<16x128xf32>
      %302 = arith.subf %301, %298 : vector<16x128xf32>
      %303 = arith.minimumf %298, %302 : vector<16x128xf32>
      %304 = math.exp %303 : vector<16x128xf32>
      %cst_46 = arith.constant 1.000000e+00 : f32
      %305 = vector.broadcast %cst_46 : f32 to vector<16x128xf32>
      %306 = arith.addf %305, %304 : vector<16x128xf32>
      %307 = math.log %306 : vector<16x128xf32>
      %308 = arith.addf %300, %307 : vector<16x128xf32>
      %309 = vector.broadcast %50 : f32 to vector<16x128xf32>
      %310 = arith.mulf %308, %309 : vector<16x128xf32>
      %311 = arith.addf %294, %310 : vector<16x128xf32>
      %312 = vector.broadcast %19 : f32 to vector<16x128xf32>
      %313 = arith.mulf %65, %312 : vector<16x128xf32>
      %314 = vector.broadcast %35 : f32 to vector<16x128xf32>
      %315 = arith.addf %313, %314 : vector<16x128xf32>
      %cst_47 = arith.constant 0.000000e+00 : f32
      %316 = vector.broadcast %cst_47 : f32 to vector<16x128xf32>
      %317 = arith.maximumf %315, %316 : vector<16x128xf32>
      %cst_48 = arith.constant 0.000000e+00 : f32
      %318 = vector.broadcast %cst_48 : f32 to vector<16x128xf32>
      %319 = arith.subf %318, %315 : vector<16x128xf32>
      %320 = arith.minimumf %315, %319 : vector<16x128xf32>
      %321 = math.exp %320 : vector<16x128xf32>
      %cst_49 = arith.constant 1.000000e+00 : f32
      %322 = vector.broadcast %cst_49 : f32 to vector<16x128xf32>
      %323 = arith.addf %322, %321 : vector<16x128xf32>
      %324 = math.log %323 : vector<16x128xf32>
      %325 = arith.addf %317, %324 : vector<16x128xf32>
      %326 = vector.broadcast %51 : f32 to vector<16x128xf32>
      %327 = arith.mulf %325, %326 : vector<16x128xf32>
      %328 = arith.addf %311, %327 : vector<16x128xf32>
      %329 = vector.broadcast %20 : f32 to vector<16x128xf32>
      %330 = arith.mulf %65, %329 : vector<16x128xf32>
      %331 = vector.broadcast %36 : f32 to vector<16x128xf32>
      %332 = arith.addf %330, %331 : vector<16x128xf32>
      %cst_50 = arith.constant 0.000000e+00 : f32
      %333 = vector.broadcast %cst_50 : f32 to vector<16x128xf32>
      %334 = arith.maximumf %332, %333 : vector<16x128xf32>
      %cst_51 = arith.constant 0.000000e+00 : f32
      %335 = vector.broadcast %cst_51 : f32 to vector<16x128xf32>
      %336 = arith.subf %335, %332 : vector<16x128xf32>
      %337 = arith.minimumf %332, %336 : vector<16x128xf32>
      %338 = math.exp %337 : vector<16x128xf32>
      %cst_52 = arith.constant 1.000000e+00 : f32
      %339 = vector.broadcast %cst_52 : f32 to vector<16x128xf32>
      %340 = arith.addf %339, %338 : vector<16x128xf32>
      %341 = math.log %340 : vector<16x128xf32>
      %342 = arith.addf %334, %341 : vector<16x128xf32>
      %343 = vector.broadcast %52 : f32 to vector<16x128xf32>
      %344 = arith.mulf %342, %343 : vector<16x128xf32>
      %345 = arith.addf %328, %344 : vector<16x128xf32>
      %346 = vector.broadcast %21 : f32 to vector<16x128xf32>
      %347 = arith.mulf %65, %346 : vector<16x128xf32>
      %348 = vector.broadcast %37 : f32 to vector<16x128xf32>
      %349 = arith.addf %347, %348 : vector<16x128xf32>
      %cst_53 = arith.constant 0.000000e+00 : f32
      %350 = vector.broadcast %cst_53 : f32 to vector<16x128xf32>
      %351 = arith.maximumf %349, %350 : vector<16x128xf32>
      %cst_54 = arith.constant 0.000000e+00 : f32
      %352 = vector.broadcast %cst_54 : f32 to vector<16x128xf32>
      %353 = arith.subf %352, %349 : vector<16x128xf32>
      %354 = arith.minimumf %349, %353 : vector<16x128xf32>
      %355 = math.exp %354 : vector<16x128xf32>
      %cst_55 = arith.constant 1.000000e+00 : f32
      %356 = vector.broadcast %cst_55 : f32 to vector<16x128xf32>
      %357 = arith.addf %356, %355 : vector<16x128xf32>
      %358 = math.log %357 : vector<16x128xf32>
      %359 = arith.addf %351, %358 : vector<16x128xf32>
      %360 = vector.broadcast %53 : f32 to vector<16x128xf32>
      %361 = arith.mulf %359, %360 : vector<16x128xf32>
      %362 = arith.addf %345, %361 : vector<16x128xf32>
      %363 = arith.index_cast %63 : i32 to index
      %c0_56 = arith.constant 0 : index
      %364 = vector.load %arg4[%363, %c0_56] : memref<16x128xf32, #tpu.memory_space<vmem>>, vector<16x128xf32>
      tpu.vector_store %arg4[%363, %c0_56], %362 {strides = array<i32>} : memref<16x128xf32, #tpu.memory_space<vmem>>, vector<16x128xf32>,
      %c1_i32 = arith.constant 1 : i32
    } else {
    }
    return
  }
  func.func @transform_0(%arg0: i32) -> i32 {
    %c0_i32 = arith.constant 0 : i32
    %c0_i32_0 = arith.constant 0 : i32
    return %c0_i32 : i32
  }
  func.func @transform_1(%arg0: i32) -> i32 {
    %c0_i32 = arith.constant 0 : i32
    %c0_i32_0 = arith.constant 0 : i32
    return %c0_i32 : i32
  }
  func.func @transform_2(%arg0: i32) -> (i32, i32) {
    %c0_i32 = arith.constant 0 : i32
    %c0_i32_0 = arith.constant 0 : i32
    return %arg0, %c0_i32 : i32, i32
  }
  func.func @transform_3(%arg0: i32) -> (i32, i32) {
    %c0_i32 = arith.constant 0 : i32
    %c0_i32_0 = arith.constant 0 : i32
    return %arg0, %c0_i32 : i32, i32
  }
}

</mosaic_0001>

<llo_original>
// kernel: tpu_custom_call.1
$region0: #{tpu_custom_call.1}
  #allocation0 [shape = 'u32[]', space=smem, size = 0x4, offset = 0x4, fixed_abs, tag = 'smem constant byte address 0x4 - core index']
  #allocation1 [shape = 'u32[144,128]{1,0:T(1,128)}', space=vmem, size = 0x12000, scoped, tag = 'internal scratch']
  #allocation2 [shape = 's32[1]{0:T(128)S(6)}', space=smem, size = 0x200, scoped, tag = 'scoped memory for tpu_custom_call.1']
  %s0 = inlined_call_operand.<no memory space> [shape: s32[1], index: 0, kind: input, shape index: {}]
  %s1 = inlined_call_operand.vmem [shape: f32[64], index: 1, kind: input, shape index: {}]
  %s2 = inlined_call_operand.hbm [shape: f32[16,128], index: 2, kind: input, shape index: {}]
  %s3 = inlined_call_operand.hbm [shape: f32[16,128], index: 3, kind: output, shape index: {}]
  %s4 = sld [smem:[#allocation0]]
  $region38: #{tpu_custom_call.1} parent=0
    _
  %s6 = ssub.s32 1, %s4
  %s7 = scalar_select 0, %s6, %s4
  %8 = sst [smem:[#allocation2]] %s0
  $region1: #{tpu_custom_call.1} parent=0
    #allocation3 [shape = 'u8[512]{0}', space=smem, size = 0x200, scoped, tag = 'input window, operand 1, single buffered']
    #allocation4 [shape = 's32[1]{0}', space=sflag, size = 0x4, scoped, tag = 'scoped memory for tpu_custom_call.1']
    #allocation5 [shape = 's32[1]{0}', space=sflag, size = 0x4, scoped, tag = 'scoped memory for tpu_custom_call.1']
    #allocation6 [shape = 's32[1]{0}', space=sflag, size = 0x4, scoped, tag = 'scoped memory for tpu_custom_call.1']
    #allocation7 [shape = 'u8[8192]{0}', space=vmem, size = 0x2000, scoped, tag = 'input window, operand 2, single buffered']
    #allocation8 [shape = 'u8[8192]{0}', space=vmem, size = 0x2000, scoped, tag = 'output window, operand 0, single buffered']
    %9 = vsyncpa [#allocation6], 0
    %10 = vsyncpa [#allocation4], 0
    %11 = vsyncpa [#allocation5], 0
    // Predicated region
    $region2: #{tpu_custom_call.1} parent=1 // pred_check
      _
    $region3: #{tpu_custom_call.1} parent=1 // pred_check_branch
      %13 = sbr.rel (0) target = $region5
    $region4: #{tpu_custom_call.1} parent=1 // pred_region
      _
    $region5: #{tpu_custom_call.1} parent=1 // pred_fallthru
      _
    // Predicated region
    $region6: #{tpu_custom_call.1} parent=1 // pred_check
      _
    $region7: #{tpu_custom_call.1} parent=1 // pred_check_branch
      %15 = sbr.rel (0) target = $region9
    $region8: #{tpu_custom_call.1} parent=1 // pred_region
      %s17 = ssub.s32 16, 16
      %18 = vsyncadd [#allocation6], %s17
      %s20 = sshll.u32 %s1, 4
      %s21 = int_to_ptr.vmem [resolvable:$true] %s20
      %23 = dma.vmem_to_smem %s21, 16, [#allocation3], [#allocation6]
    $region9: #{tpu_custom_call.1} parent=1 // pred_fallthru
      _
    // Predicated region
    $region10: #{tpu_custom_call.1} parent=1 // pred_check
      _
    $region11: #{tpu_custom_call.1} parent=1 // pred_check_branch
      %25 = sbr.rel (0) target = $region13
    $region12: #{tpu_custom_call.1} parent=1 // pred_region
      %s27 = ssub.s32 256, 256
      %28 = vsyncadd [#allocation4], %s27
      %s29 = sshll.u32 [#allocation7], 4
      %s30 = int_to_ptr.vmem [resolvable:$true] %s29
      %35 = dma.hbm_to_vmem [thread:$0]  %s2, 256, %s30, [#allocation4], 128, 128, 8
    $region13: #{tpu_custom_call.1} parent=1 // pred_fallthru
      _
    // Predicated region
    $region14: #{tpu_custom_call.1} parent=1 // pred_check
      _
    $region15: #{tpu_custom_call.1} parent=1 // pred_check_branch
      %37 = sbr.rel (0) target = $region17
    $region16: #{tpu_custom_call.1} parent=1 // pred_region
      %38 = dma.done [#allocation6], 16
    $region17: #{tpu_custom_call.1} parent=1 // pred_fallthru
      _
    // Predicated region
    $region18: #{tpu_custom_call.1} parent=1 // pred_check
      _
    $region19: #{tpu_custom_call.1} parent=1 // pred_check_branch
      %40 = sbr.rel (0) target = $region21
    $region20: #{tpu_custom_call.1} parent=1 // pred_region
      %41 = dma.done [#allocation4], 256
    $region21: #{tpu_custom_call.1} parent=1 // pred_fallthru
      _
    %42 = sfence
    %s43 = sld [smem:[#allocation3]]
    %s44 = sld [smem:[#allocation3 + $0x1]]
    %s45 = sld [smem:[#allocation3 + $0x2]]
    %s46 = sld [smem:[#allocation3 + $0x3]]
    %s47 = sld [smem:[#allocation3 + $0x4]]
    %s48 = sld [smem:[#allocation3 + $0x5]]
    %s49 = sld [smem:[#allocation3 + $0x8]]
    %s50 = sld [smem:[#allocation3 + $0x9]]
    %s51 = sld [smem:[#allocation3 + $0xa]]
    %s52 = sld [smem:[#allocation3 + $0xb]]
    %s53 = sld [smem:[#allocation3 + $0xc]]
    %s54 = sld [smem:[#allocation3 + $0xd]]
    %s55 = sld [smem:[#allocation3 + $0xe]]
    %s56 = sld [smem:[#allocation3 + $0xf]]
    %s57 = sld [smem:[#allocation3 + $0x10]]
    %s58 = sld [smem:[#allocation3 + $0x11]]
    %s59 = sld [smem:[#allocation3 + $0x12]]
    %s60 = sld [smem:[#allocation3 + $0x13]]
    %s61 = sld [smem:[#allocation3 + $0x14]]
    %s62 = sld [smem:[#allocation3 + $0x15]]
    %s63 = sld [smem:[#allocation3 + $0x16]]
    %s64 = sld [smem:[#allocation3 + $0x17]]
    %s65 = sld [smem:[#allocation3 + $0x18]]
    %s66 = sld [smem:[#allocation3 + $0x19]]
    %s67 = sld [smem:[#allocation3 + $0x1a]]
    %s68 = sld [smem:[#allocation3 + $0x1b]]
    %s69 = sld [smem:[#allocation3 + $0x1c]]
    %s70 = sld [smem:[#allocation3 + $0x1d]]
    %s71 = sld [smem:[#allocation3 + $0x1e]]
    %s72 = sld [smem:[#allocation3 + $0x1f]]
    %s73 = sld [smem:[#allocation3 + $0x20]]
    %s74 = sld [smem:[#allocation3 + $0x21]]
    %s75 = sld [smem:[#allocation3 + $0x22]]
    %s76 = sld [smem:[#allocation3 + $0x23]]
    %s77 = sld [smem:[#allocation3 + $0x24]]
    %s78 = sld [smem:[#allocation3 + $0x25]]
    %s79 = sld [smem:[#allocation3 + $0x26]]
    %s80 = sld [smem:[#allocation3 + $0x27]]
    %s81 = sld [smem:[#allocation3 + $0x28]]
    %s82 = sld [smem:[#allocation3 + $0x29]]
    %s83 = sld [smem:[#allocation3 + $0x2a]]
    %s84 = sld [smem:[#allocation3 + $0x2b]]
    %s85 = sld [smem:[#allocation3 + $0x2c]]
    %s86 = sld [smem:[#allocation3 + $0x2d]]
    %s87 = sld [smem:[#allocation3 + $0x2e]]
    %s88 = sld [smem:[#allocation3 + $0x2f]]
    %s89 = sld [smem:[#allocation3 + $0x30]]
    %s90 = sld [smem:[#allocation3 + $0x31]]
    %s91 = sld [smem:[#allocation3 + $0x32]]
    %s92 = sld [smem:[#allocation3 + $0x33]]
    %s93 = sld [smem:[#allocation3 + $0x34]]
    %s94 = sld [smem:[#allocation3 + $0x35]]
    %s95 = sld [smem:[#allocation3 + $0x36]]
    %s96 = sld [smem:[#allocation3 + $0x37]]
    %s97 = sld [smem:[#allocation2]]
    %p98 = scmp.ne.s32.totalorder %s97, 0
    // Predicated region
    $region22: #{tpu_custom_call.1} parent=1 // pred_check
      %p99 = pneg %p98
    $region23: #{tpu_custom_call.1} parent=1 // pred_check_branch
      %101 = sbr.rel (%p99) target = $region25
    $region24: #{tpu_custom_call.1} parent=1 // pred_region
      %v102 = vld [vmem:[#allocation7] sm:$0xff]
      %v103 = vld [vmem:[#allocation7 + $0x8] sm:$0xff]
      %v104 = vstv %s43
      %v105 = vmul.f32 %v102, %v104
      %v106 = vmul.f32 %v103, %v104
      %v107 = vstv %s44
      %v108 = vadd.f32 %v105, %v107
      %v109 = vadd.f32 %v106, %v107
      %v110 = vrcp.pop %v108
      %v111 = vrcp.pop %v109
      %v112 = vmul.f32 %v108, %v108
      %v113 = vmul.f32 %v109, %v109
      %v114 = vmul.f32 %v110, -309.0
      %v115 = vmul.f32 %v111, -309.0
      %v116 = vmul.f32 %v114, 1.442695
      %v117 = vpow.pop %v116
      %v118 = vmul.f32 %v115, 1.442695
      %v119 = vpow.pop %v118
      %v120 = vsub.f32 1.0, %v117
      %v121 = vsub.f32 1.0, %v119
      %v122 = vlog2.pop %v120
      %v123 = vmul.f32 %v122, 0.6931472
      %v124 = vlog2.pop %v121
      %v125 = vmul.f32 %v124, 0.6931472
      %v126 = vmul.f32 %v108, %v123
      %v127 = vmul.f32 %v109, %v125
      %v128 = vstv %s46
      %v129 = vmul.f32 %v128, %v126
      %v130 = vmul.f32 %v128, %v127
      %v131 = vstv %s45
      %v132 = vadd.f32 %v131, %v129
      %v133 = vadd.f32 %v131, %v130
      %v134 = vstv %s47
      %v135 = vmul.f32 %v134, %v112
      %v136 = vmul.f32 %v134, %v113
      %v137 = vadd.f32 %v132, %v135
      %v138 = vadd.f32 %v133, %v136
      %v139 = vmul.f32 %v112, %v112
      %v140 = vmul.f32 %v113, %v113
      %v141 = vmul.f32 %v139, %v108
      %v142 = vmul.f32 %v140, %v109
      %v143 = vstv %s48
      %v144 = vmul.f32 %v143, %v141
      %v145 = vmul.f32 %v143, %v142
      %v146 = vadd.f32 %v137, %v144
      %v147 = vadd.f32 %v138, %v145
      %v148 = vstv %s49
      %v149 = vmul.f32 %v102, %v148
      %v150 = vmul.f32 %v103, %v148
      %v151 = vstv %s65
      %v152 = vadd.f32 %v149, %v151
      %v153 = vadd.f32 %v150, %v151
      %v154 = vmax.f32 %v152, 0.0
      %v155 = vmax.f32 %v153, 0.0
      %v156 = vstv %s81
      %v157 = vmul.f32 %v154, %v156
      %v158 = vmul.f32 %v155, %v156
      %v159 = vadd.f32 %v146, %v157
      %v160 = vadd.f32 %v147, %v158
      %v161 = vstv %s50
      %v162 = vmul.f32 %v102, %v161
      %v163 = vmul.f32 %v103, %v161
      %v164 = vstv %s66
      %v165 = vadd.f32 %v162, %v164
      %v166 = vadd.f32 %v163, %v164
      %v167 = vmax.f32 %v165, 0.0
      %v168 = vmax.f32 %v166, 0.0
      %v169 = vstv %s82
      %v170 = vmul.f32 %v167, %v169
      %v171 = vmul.f32 %v168, %v169
      %v172 = vadd.f32 %v159, %v170
      %v173 = vadd.f32 %v160, %v171
      %v174 = vstv %s51
      %v175 = vmul.f32 %v102, %v174
      %v176 = vmul.f32 %v103, %v174
      %v177 = vstv %s67
      %v178 = vadd.f32 %v175, %v177
      %v179 = vadd.f32 %v176, %v177
      %v180 = vmax.f32 %v178, 0.0
      %v181 = vmax.f32 %v179, 0.0
      %v182 = vstv %s83
      %v183 = vmul.f32 %v180, %v182
      %v184 = vmul.f32 %v181, %v182
      %v185 = vadd.f32 %v172, %v183
      %v186 = vadd.f32 %v173, %v184
      %v187 = vstv %s52
      %v188 = vmul.f32 %v102, %v187
      %v189 = vmul.f32 %v103, %v187
      %v190 = vstv %s68
      %v191 = vadd.f32 %v188, %v190
      %v192 = vadd.f32 %v189, %v190
      %v193 = vmax.f32 %v191, 0.0
      %v194 = vmax.f32 %v192, 0.0
      %v195 = vstv %s84
      %v196 = vmul.f32 %v193, %v195
      %v197 = vmul.f32 %v194, %v195
      %v198 = vadd.f32 %v185, %v196
      %v199 = vadd.f32 %v186, %v197
      %v200 = vstv %s53
      %v201 = vmul.f32 %v102, %v200
      %v202 = vmul.f32 %v103, %v200
      %v203 = vstv %s69
      %v204 = vadd.f32 %v201, %v203
      %v205 = vadd.f32 %v202, %v203
      %v206 = vmax.f32 %v204, 0.0
      %v207 = vmax.f32 %v205, 0.0
      %v208 = vstv %s85
      %v209 = vmul.f32 %v206, %v208
      %v210 = vmul.f32 %v207, %v208
      %v211 = vadd.f32 %v198, %v209
      %v212 = vadd.f32 %v199, %v210
      %v213 = vstv %s54
      %v214 = vmul.f32 %v102, %v213
      %v215 = vmul.f32 %v103, %v213
      %v216 = vstv %s70
      %v217 = vadd.f32 %v214, %v216
      %v218 = vadd.f32 %v215, %v216
      %v219 = vmax.f32 %v217, 0.0
      %v220 = vmax.f32 %v218, 0.0
      %v221 = vstv %s86
      %v222 = vmul.f32 %v219, %v221
      %v223 = vmul.f32 %v220, %v221
      %v224 = vadd.f32 %v211, %v222
      %v225 = vadd.f32 %v212, %v223
      %v226 = vstv %s55
      %v227 = vmul.f32 %v102, %v226
      %v228 = vmul.f32 %v103, %v226
      %v229 = vstv %s71
      %v230 = vadd.f32 %v227, %v229
      %v231 = vadd.f32 %v228, %v229
      %v232 = vmax.f32 %v230, 0.0
      %v233 = vmax.f32 %v231, 0.0
      %v234 = vstv %s87
      %v235 = vmul.f32 %v232, %v234
      %v236 = vmul.f32 %v233, %v234
      %v237 = vadd.f32 %v224, %v235
      %v238 = vadd.f32 %v225, %v236
      %v239 = vstv %s56
      %v240 = vmul.f32 %v102, %v239
      %v241 = vmul.f32 %v103, %v239
      %v242 = vstv %s72
      %v243 = vadd.f32 %v240, %v242
      %v244 = vadd.f32 %v241, %v242
      %v245 = vmax.f32 %v243, 0.0
      %v246 = vmax.f32 %v244, 0.0
      %v247 = vstv %s88
      %v248 = vmul.f32 %v245, %v247
      %v249 = vmul.f32 %v246, %v247
      %v250 = vadd.f32 %v237, %v248
      %v251 = vadd.f32 %v238, %v249
      %v252 = vstv %s57
      %v253 = vmul.f32 %v102, %v252
      %v254 = vmul.f32 %v103, %v252
      %v255 = vstv %s73
      %v256 = vadd.f32 %v253, %v255
      %v257 = vadd.f32 %v254, %v255
      %v258 = vmax.f32 %v256, 0.0
      %v259 = vmax.f32 %v257, 0.0
      %v260 = vstv %s89
      %v261 = vmul.f32 %v258, %v260
      %v262 = vmul.f32 %v259, %v260
      %v263 = vadd.f32 %v250, %v261
      %v264 = vadd.f32 %v251, %v262
      %v265 = vstv %s58
      %v266 = vmul.f32 %v102, %v265
      %v267 = vmul.f32 %v103, %v265
      %v268 = vstv %s74
      %v269 = vadd.f32 %v266, %v268
      %v270 = vadd.f32 %v267, %v268
      %v271 = vmax.f32 %v269, 0.0
      %v272 = vmax.f32 %v270, 0.0
      %v273 = vstv %s90
      %v274 = vmul.f32 %v271, %v273
      %v275 = vmul.f32 %v272, %v273
      %v276 = vadd.f32 %v263, %v274
      %v277 = vadd.f32 %v264, %v275
      %v278 = vstv %s59
      %v279 = vmul.f32 %v102, %v278
      %v280 = vmul.f32 %v103, %v278
      %v281 = vstv %s75
      %v282 = vadd.f32 %v279, %v281
      %v283 = vadd.f32 %v280, %v281
      %v284 = vmax.f32 %v282, 0.0
      %v285 = vmax.f32 %v283, 0.0
      %v286 = vstv %s91
      %v287 = vmul.f32 %v284, %v286
      %v288 = vmul.f32 %v285, %v286
      %v289 = vadd.f32 %v276, %v287
      %v290 = vadd.f32 %v277, %v288
      %v291 = vstv %s60
      %v292 = vmul.f32 %v102, %v291
      %v293 = vmul.f32 %v103, %v291
      %v294 = vstv %s76
      %v295 = vadd.f32 %v292, %v294
      %v296 = vadd.f32 %v293, %v294
      %v297 = vmax.f32 %v295, 0.0
      %v298 = vmax.f32 %v296, 0.0
      %v299 = vstv %s92
      %v300 = vmul.f32 %v297, %v299
      %v301 = vmul.f32 %v298, %v299
      %v302 = vadd.f32 %v289, %v300
      %v303 = vadd.f32 %v290, %v301
      %v304 = vstv %s61
      %v305 = vmul.f32 %v102, %v304
      %v306 = vmul.f32 %v103, %v304
      %v307 = vstv %s77
      %v308 = vadd.f32 %v305, %v307
      %v309 = vadd.f32 %v306, %v307
      %v310 = vmax.f32 %v308, 0.0
      %v311 = vmax.f32 %v309, 0.0
      %v312 = vstv %s93
      %v313 = vmul.f32 %v310, %v312
      %v314 = vmul.f32 %v311, %v312
      %v315 = vadd.f32 %v302, %v313
      %v316 = vadd.f32 %v303, %v314
      %v317 = vstv %s62
      %v318 = vmul.f32 %v102, %v317
      %v319 = vmul.f32 %v103, %v317
      %v320 = vstv %s78
      %v321 = vadd.f32 %v318, %v320
      %v322 = vadd.f32 %v319, %v320
      %v323 = vmax.f32 %v321, 0.0
      %v324 = vmax.f32 %v322, 0.0
      %v325 = vstv %s94
      %v326 = vmul.f32 %v323, %v325
      %v327 = vmul.f32 %v324, %v325
      %v328 = vadd.f32 %v315, %v326
      %v329 = vadd.f32 %v316, %v327
      %v330 = vstv %s63
      %v331 = vmul.f32 %v102, %v330
      %v332 = vmul.f32 %v103, %v330
      %v333 = vstv %s79
      %v334 = vadd.f32 %v331, %v333
      %v335 = vadd.f32 %v332, %v333
      %v336 = vmax.f32 %v334, 0.0
      %v337 = vmax.f32 %v335, 0.0
      %v338 = vstv %s95
      %v339 = vmul.f32 %v336, %v338
      %v340 = vmul.f32 %v337, %v338
      %v341 = vadd.f32 %v328, %v339
      %v342 = vadd.f32 %v329, %v340
      %v343 = vstv %s64
      %v344 = vmul.f32 %v102, %v343
      %v345 = vmul.f32 %v103, %v343
      %v346 = vstv %s80
      %v347 = vadd.f32 %v344, %v346
      %v348 = vadd.f32 %v345, %v346
      %v349 = vmax.f32 %v347, 0.0
      %v350 = vmax.f32 %v348, 0.0
      %v351 = vstv %s96
      %v352 = vmul.f32 %v349, %v351
      %v353 = vmul.f32 %v350, %v351
      %v354 = vadd.f32 %v341, %v352
      %v355 = vadd.f32 %v342, %v353
      %356 = vst [vmem:[#allocation8] sm:$0xff] %v354
      %357 = vst [vmem:[#allocation8 + $0x8] sm:$0xff] %v355
    $region25: #{tpu_custom_call.1} parent=1 // pred_fallthru
      _
    %s358 = sld [smem:[#allocation2]]
    %p359 = scmp.eq.s32.totalorder %s358, 0
    // Predicated region
    $region26: #{tpu_custom_call.1} parent=1 // pred_check
      %p360 = pneg %p359
    $region27: #{tpu_custom_call.1} parent=1 // pred_check_branch
      %362 = sbr.rel (%p360) target = $region29
    $region28: #{tpu_custom_call.1} parent=1 // pred_region
      %v363 = vld [vmem:[#allocation7] sm:$0xff]
      %v364 = vld [vmem:[#allocation7 + $0x8] sm:$0xff]
      %v365 = vstv %s43
      %v366 = vmul.f32 %v363, %v365
      %v367 = vmul.f32 %v364, %v365
      %v368 = vstv %s44
      %v369 = vadd.f32 %v366, %v368
      %v370 = vadd.f32 %v367, %v368
      %v371 = vrcp.pop %v369
      %v372 = vrcp.pop %v370
      %v373 = vmul.f32 %v369, %v369
      %v374 = vmul.f32 %v370, %v370
      %v375 = vmul.f32 %v371, -309.0
      %v376 = vmul.f32 %v372, -309.0
      %v377 = vmul.f32 %v375, 1.442695
      %v378 = vpow.pop %v377
      %v379 = vmul.f32 %v376, 1.442695
      %v380 = vpow.pop %v379
      %v381 = vsub.f32 1.0, %v378
      %v382 = vsub.f32 1.0, %v380
      %v383 = vlog2.pop %v381
      %v384 = vmul.f32 %v383, 0.6931472
      %v385 = vlog2.pop %v382
      %v386 = vmul.f32 %v385, 0.6931472
      %v387 = vmul.f32 %v369, %v384
      %v388 = vmul.f32 %v370, %v386
      %v389 = vstv %s46
      %v390 = vmul.f32 %v389, %v387
      %v391 = vmul.f32 %v389, %v388
      %v392 = vstv %s45
      %v393 = vadd.f32 %v392, %v390
      %v394 = vadd.f32 %v392, %v391
      %v395 = vstv %s47
      %v396 = vmul.f32 %v395, %v373
      %v397 = vmul.f32 %v395, %v374
      %v398 = vadd.f32 %v393, %v396
      %v399 = vadd.f32 %v394, %v397
      %v400 = vmul.f32 %v373, %v373
      %v401 = vmul.f32 %v374, %v374
      %v402 = vmul.f32 %v400, %v369
      %v403 = vmul.f32 %v401, %v370
      %v404 = vstv %s48
      %v405 = vmul.f32 %v404, %v402
      %v406 = vmul.f32 %v404, %v403
      %v407 = vadd.f32 %v398, %v405
      %v408 = vadd.f32 %v399, %v406
      %v409 = vstv %s49
      %v410 = vmul.f32 %v363, %v409
      %v411 = vmul.f32 %v364, %v409
      %v412 = vstv %s65
      %v413 = vadd.f32 %v410, %v412
      %v414 = vadd.f32 %v411, %v412
      %v415 = vmax.f32 %v413, 0.0
      %v416 = vmax.f32 %v414, 0.0
      %v417 = vsub.f32 0.0, %v413
      %v418 = vsub.f32 0.0, %v414
      %v419 = vmin.f32 %v413, %v417
      %v420 = vmin.f32 %v414, %v418
      %v421 = vmul.f32 %v419, 1.442695
      %v422 = vpow.pop %v421
      %v423 = vmul.f32 %v420, 1.442695
      %v424 = vpow.pop %v423
      %v425 = vadd.f32 %v422, 1.0
      %v426 = vadd.f32 %v424, 1.0
      %v427 = vlog2.pop %v425
      %v428 = vmul.f32 %v427, 0.6931472
      %v429 = vlog2.pop %v426
      %v430 = vmul.f32 %v429, 0.6931472
      %v431 = vadd.f32 %v415, %v428
      %v432 = vadd.f32 %v416, %v430
      %v433 = vstv %s81
      %v434 = vmul.f32 %v431, %v433
      %v435 = vmul.f32 %v432, %v433
      %v436 = vadd.f32 %v407, %v434
      %v437 = vadd.f32 %v408, %v435
      %v438 = vstv %s50
      %v439 = vmul.f32 %v363, %v438
      %v440 = vmul.f32 %v364, %v438
      %v441 = vstv %s66
      %v442 = vadd.f32 %v439, %v441
      %v443 = vadd.f32 %v440, %v441
      %v444 = vmax.f32 %v442, 0.0
      %v445 = vmax.f32 %v443, 0.0
      %v446 = vsub.f32 0.0, %v442
      %v447 = vsub.f32 0.0, %v443
      %v448 = vmin.f32 %v442, %v446
      %v449 = vmin.f32 %v443, %v447
      %v450 = vmul.f32 %v448, 1.442695
      %v451 = vpow.pop %v450
      %v452 = vmul.f32 %v449, 1.442695
      %v453 = vpow.pop %v452
      %v454 = vadd.f32 %v451, 1.0
      %v455 = vadd.f32 %v453, 1.0
      %v456 = vlog2.pop %v454
      %v457 = vmul.f32 %v456, 0.6931472
      %v458 = vlog2.pop %v455
      %v459 = vmul.f32 %v458, 0.6931472
      %v460 = vadd.f32 %v444, %v457
      %v461 = vadd.f32 %v445, %v459
      %v462 = vstv %s82
      %v463 = vmul.f32 %v460, %v462
      %v464 = vmul.f32 %v461, %v462
      %v465 = vadd.f32 %v436, %v463
      %v466 = vadd.f32 %v437, %v464
      %v467 = vstv %s51
      %v468 = vmul.f32 %v363, %v467
      %v469 = vmul.f32 %v364, %v467
      %v470 = vstv %s67
      %v471 = vadd.f32 %v468, %v470
      %v472 = vadd.f32 %v469, %v470
      %v473 = vmax.f32 %v471, 0.0
      %v474 = vmax.f32 %v472, 0.0
      %v475 = vsub.f32 0.0, %v471
      %v476 = vsub.f32 0.0, %v472
      %v477 = vmin.f32 %v471, %v475
      %v478 = vmin.f32 %v472, %v476
      %v479 = vmul.f32 %v477, 1.442695
      %v480 = vpow.pop %v479
      %v481 = vmul.f32 %v478, 1.442695
      %v482 = vpow.pop %v481
      %v483 = vadd.f32 %v480, 1.0
      %v484 = vadd.f32 %v482, 1.0
      %v485 = vlog2.pop %v483
      %v486 = vmul.f32 %v485, 0.6931472
      %v487 = vlog2.pop %v484
      %v488 = vmul.f32 %v487, 0.6931472
      %v489 = vadd.f32 %v473, %v486
      %v490 = vadd.f32 %v474, %v488
      %v491 = vstv %s83
      %v492 = vmul.f32 %v489, %v491
      %v493 = vmul.f32 %v490, %v491
      %v494 = vadd.f32 %v465, %v492
      %v495 = vadd.f32 %v466, %v493
      %v496 = vstv %s52
      %v497 = vmul.f32 %v363, %v496
      %v498 = vmul.f32 %v364, %v496
      %v499 = vstv %s68
      %v500 = vadd.f32 %v497, %v499
      %v501 = vadd.f32 %v498, %v499
      %v502 = vmax.f32 %v500, 0.0
      %v503 = vmax.f32 %v501, 0.0
      %v504 = vsub.f32 0.0, %v500
      %v505 = vsub.f32 0.0, %v501
      %v506 = vmin.f32 %v500, %v504
      %v507 = vmin.f32 %v501, %v505
      %v508 = vmul.f32 %v506, 1.442695
      %v509 = vpow.pop %v508
      %v510 = vmul.f32 %v507, 1.442695
      %v511 = vpow.pop %v510
      %v512 = vadd.f32 %v509, 1.0
      %v513 = vadd.f32 %v511, 1.0
      %v514 = vlog2.pop %v512
      %v515 = vmul.f32 %v514, 0.6931472
      %v516 = vlog2.pop %v513
      %v517 = vmul.f32 %v516, 0.6931472
      %v518 = vadd.f32 %v502, %v515
      %v519 = vadd.f32 %v503, %v517
      %v520 = vstv %s84
      %v521 = vmul.f32 %v518, %v520
      %v522 = vmul.f32 %v519, %v520
      %v523 = vadd.f32 %v494, %v521
      %v524 = vadd.f32 %v495, %v522
      %v525 = vstv %s53
      %v526 = vmul.f32 %v363, %v525
      %v527 = vmul.f32 %v364, %v525
      %v528 = vstv %s69
      %v529 = vadd.f32 %v526, %v528
      %v530 = vadd.f32 %v527, %v528
      %v531 = vmax.f32 %v529, 0.0
      %v532 = vmax.f32 %v530, 0.0
      %v533 = vsub.f32 0.0, %v529
      %v534 = vsub.f32 0.0, %v530
      %v535 = vmin.f32 %v529, %v533
      %v536 = vmin.f32 %v530, %v534
      %v537 = vmul.f32 %v535, 1.442695
      %v538 = vpow.pop %v537
      %v539 = vmul.f32 %v536, 1.442695
      %v540 = vpow.pop %v539
      %v541 = vadd.f32 %v538, 1.0
      %v542 = vadd.f32 %v540, 1.0
      %v543 = vlog2.pop %v541
      %v544 = vmul.f32 %v543, 0.6931472
      %v545 = vlog2.pop %v542
      %v546 = vmul.f32 %v545, 0.6931472
      %v547 = vadd.f32 %v531, %v544
      %v548 = vadd.f32 %v532, %v546
      %v549 = vstv %s85
      %v550 = vmul.f32 %v547, %v549
      %v551 = vmul.f32 %v548, %v549
      %v552 = vadd.f32 %v523, %v550
      %v553 = vadd.f32 %v524, %v551
      %v554 = vstv %s54
      %v555 = vmul.f32 %v363, %v554
      %v556 = vmul.f32 %v364, %v554
      %v557 = vstv %s70
      %v558 = vadd.f32 %v555, %v557
      %v559 = vadd.f32 %v556, %v557
      %v560 = vmax.f32 %v558, 0.0
      %v561 = vmax.f32 %v559, 0.0
      %v562 = vsub.f32 0.0, %v558
      %v563 = vsub.f32 0.0, %v559
      %v564 = vmin.f32 %v558, %v562
      %v565 = vmin.f32 %v559, %v563
      %v566 = vmul.f32 %v564, 1.442695
      %v567 = vpow.pop %v566
      %v568 = vmul.f32 %v565, 1.442695
      %v569 = vpow.pop %v568
      %v570 = vadd.f32 %v567, 1.0
      %v571 = vadd.f32 %v569, 1.0
      %v572 = vlog2.pop %v570
      %v573 = vmul.f32 %v572, 0.6931472
      %v574 = vlog2.pop %v571
      %v575 = vmul.f32 %v574, 0.6931472
      %v576 = vadd.f32 %v560, %v573
      %v577 = vadd.f32 %v561, %v575
      %v578 = vstv %s86
      %v579 = vmul.f32 %v576, %v578
      %v580 = vmul.f32 %v577, %v578
      %v581 = vadd.f32 %v552, %v579
      %v582 = vadd.f32 %v553, %v580
      %v583 = vstv %s55
      %v584 = vmul.f32 %v363, %v583
      %v585 = vmul.f32 %v364, %v583
      %v586 = vstv %s71
      %v587 = vadd.f32 %v584, %v586
      %v588 = vadd.f32 %v585, %v586
      %v589 = vmax.f32 %v587, 0.0
      %v590 = vmax.f32 %v588, 0.0
      %v591 = vsub.f32 0.0, %v587
      %v592 = vsub.f32 0.0, %v588
      %v593 = vmin.f32 %v587, %v591
      %v594 = vmin.f32 %v588, %v592
      %v595 = vmul.f32 %v593, 1.442695
      %v596 = vpow.pop %v595
      %v597 = vmul.f32 %v594, 1.442695
      %v598 = vpow.pop %v597
      %v599 = vadd.f32 %v596, 1.0
      %v600 = vadd.f32 %v598, 1.0
      %v601 = vlog2.pop %v599
      %v602 = vmul.f32 %v601, 0.6931472
      %v603 = vlog2.pop %v600
      %v604 = vmul.f32 %v603, 0.6931472
      %v605 = vadd.f32 %v589, %v602
      %v606 = vadd.f32 %v590, %v604
      %v607 = vstv %s87
      %v608 = vmul.f32 %v605, %v607
      %v609 = vmul.f32 %v606, %v607
      %v610 = vadd.f32 %v581, %v608
      %v611 = vadd.f32 %v582, %v609
      %v612 = vstv %s56
      %v613 = vmul.f32 %v363, %v612
      %v614 = vmul.f32 %v364, %v612
      %v615 = vstv %s72
      %v616 = vadd.f32 %v613, %v615
      %v617 = vadd.f32 %v614, %v615
      %v618 = vmax.f32 %v616, 0.0
      %v619 = vmax.f32 %v617, 0.0
      %v620 = vsub.f32 0.0, %v616
      %v621 = vsub.f32 0.0, %v617
      %v622 = vmin.f32 %v616, %v620
      %v623 = vmin.f32 %v617, %v621
      %v624 = vmul.f32 %v622, 1.442695
      %v625 = vpow.pop %v624
      %v626 = vmul.f32 %v623, 1.442695
      %v627 = vpow.pop %v626
      %v628 = vadd.f32 %v625, 1.0
      %v629 = vadd.f32 %v627, 1.0
      %v630 = vlog2.pop %v628
      %v631 = vmul.f32 %v630, 0.6931472
      %v632 = vlog2.pop %v629
      %v633 = vmul.f32 %v632, 0.6931472
      %v634 = vadd.f32 %v618, %v631
      %v635 = vadd.f32 %v619, %v633
      %v636 = vstv %s88
      %v637 = vmul.f32 %v634, %v636
      %v638 = vmul.f32 %v635, %v636
      %v639 = vadd.f32 %v610, %v637
      %v640 = vadd.f32 %v611, %v638
      %v641 = vstv %s57
      %v642 = vmul.f32 %v363, %v641
      %v643 = vmul.f32 %v364, %v641
      %v644 = vstv %s73
      %v645 = vadd.f32 %v642, %v644
      %v646 = vadd.f32 %v643, %v644
      %v647 = vmax.f32 %v645, 0.0
      %v648 = vmax.f32 %v646, 0.0
      %v649 = vsub.f32 0.0, %v645
      %v650 = vsub.f32 0.0, %v646
      %v651 = vmin.f32 %v645, %v649
      %v652 = vmin.f32 %v646, %v650
      %v653 = vmul.f32 %v651, 1.442695
      %v654 = vpow.pop %v653
      %v655 = vmul.f32 %v652, 1.442695
      %v656 = vpow.pop %v655
      %v657 = vadd.f32 %v654, 1.0
      %v658 = vadd.f32 %v656, 1.0
      %v659 = vlog2.pop %v657
      %v660 = vmul.f32 %v659, 0.6931472
      %v661 = vlog2.pop %v658
      %v662 = vmul.f32 %v661, 0.6931472
      %v663 = vadd.f32 %v647, %v660
      %v664 = vadd.f32 %v648, %v662
      %v665 = vstv %s89
      %v666 = vmul.f32 %v663, %v665
      %v667 = vmul.f32 %v664, %v665
      %v668 = vadd.f32 %v639, %v666
      %v669 = vadd.f32 %v640, %v667
      %v670 = vstv %s58
      %v671 = vmul.f32 %v363, %v670
      %v672 = vmul.f32 %v364, %v670
      %v673 = vstv %s74
      %v674 = vadd.f32 %v671, %v673
      %v675 = vadd.f32 %v672, %v673
      %v676 = vmax.f32 %v674, 0.0
      %v677 = vmax.f32 %v675, 0.0
      %v678 = vsub.f32 0.0, %v674
      %v679 = vsub.f32 0.0, %v675
      %v680 = vmin.f32 %v674, %v678
      %v681 = vmin.f32 %v675, %v679
      %v682 = vmul.f32 %v680, 1.442695
      %v683 = vpow.pop %v682
      %v684 = vmul.f32 %v681, 1.442695
      %v685 = vpow.pop %v684
      %v686 = vadd.f32 %v683, 1.0
      %v687 = vadd.f32 %v685, 1.0
      %v688 = vlog2.pop %v686
      %v689 = vmul.f32 %v688, 0.6931472
      %v690 = vlog2.pop %v687
      %v691 = vmul.f32 %v690, 0.6931472
      %v692 = vadd.f32 %v676, %v689
      %v693 = vadd.f32 %v677, %v691
      %v694 = vstv %s90
      %v695 = vmul.f32 %v692, %v694
      %v696 = vmul.f32 %v693, %v694
      %v697 = vadd.f32 %v668, %v695
      %v698 = vadd.f32 %v669, %v696
      %v699 = vstv %s59
      %v700 = vmul.f32 %v363, %v699
      %v701 = vmul.f32 %v364, %v699
      %v702 = vstv %s75
      %v703 = vadd.f32 %v700, %v702
      %v704 = vadd.f32 %v701, %v702
      %v705 = vmax.f32 %v703, 0.0
      %v706 = vmax.f32 %v704, 0.0
      %v707 = vsub.f32 0.0, %v703
      %v708 = vsub.f32 0.0, %v704
      %v709 = vmin.f32 %v703, %v707
      %v710 = vmin.f32 %v704, %v708
      %v711 = vmul.f32 %v709, 1.442695
      %v712 = vpow.pop %v711
      %v713 = vmul.f32 %v710, 1.442695
      %v714 = vpow.pop %v713
      %v715 = vadd.f32 %v712, 1.0
      %v716 = vadd.f32 %v714, 1.0
      %v717 = vlog2.pop %v715
      %v718 = vmul.f32 %v717, 0.6931472
      %v719 = vlog2.pop %v716
      %v720 = vmul.f32 %v719, 0.6931472
      %v721 = vadd.f32 %v705, %v718
      %v722 = vadd.f32 %v706, %v720
      %v723 = vstv %s91
      %v724 = vmul.f32 %v721, %v723
      %v725 = vmul.f32 %v722, %v723
      %v726 = vadd.f32 %v697, %v724
      %v727 = vadd.f32 %v698, %v725
      %v728 = vstv %s60
      %v729 = vmul.f32 %v363, %v728
      %v730 = vmul.f32 %v364, %v728
      %v731 = vstv %s76
      %v732 = vadd.f32 %v729, %v731
      %v733 = vadd.f32 %v730, %v731
      %v734 = vmax.f32 %v732, 0.0
      %v735 = vmax.f32 %v733, 0.0
      %v736 = vsub.f32 0.0, %v732
      %v737 = vsub.f32 0.0, %v733
      %v738 = vmin.f32 %v732, %v736
      %v739 = vmin.f32 %v733, %v737
      %v740 = vmul.f32 %v738, 1.442695
      %v741 = vpow.pop %v740
      %v742 = vmul.f32 %v739, 1.442695
      %v743 = vpow.pop %v742
      %v744 = vadd.f32 %v741, 1.0
      %v745 = vadd.f32 %v743, 1.0
      %v746 = vlog2.pop %v744
      %v747 = vmul.f32 %v746, 0.6931472
      %v748 = vlog2.pop %v745
      %v749 = vmul.f32 %v748, 0.6931472
      %v750 = vadd.f32 %v734, %v747
      %v751 = vadd.f32 %v735, %v749
      %v752 = vstv %s92
      %v753 = vmul.f32 %v750, %v752
      %v754 = vmul.f32 %v751, %v752
      %v755 = vadd.f32 %v726, %v753
      %v756 = vadd.f32 %v727, %v754
      %v757 = vstv %s61
      %v758 = vmul.f32 %v363, %v757
      %v759 = vmul.f32 %v364, %v757
      %v760 = vstv %s77
      %v761 = vadd.f32 %v758, %v760
      %v762 = vadd.f32 %v759, %v760
      %v763 = vmax.f32 %v761, 0.0
      %v764 = vmax.f32 %v762, 0.0
      %v765 = vsub.f32 0.0, %v761
      %v766 = vsub.f32 0.0, %v762
      %v767 = vmin.f32 %v761, %v765
      %v768 = vmin.f32 %v762, %v766
      %v769 = vmul.f32 %v767, 1.442695
      %v770 = vpow.pop %v769
      %v771 = vmul.f32 %v768, 1.442695
      %v772 = vpow.pop %v771
      %v773 = vadd.f32 %v770, 1.0
      %v774 = vadd.f32 %v772, 1.0
      %v775 = vlog2.pop %v773
      %v776 = vmul.f32 %v775, 0.6931472
      %v777 = vlog2.pop %v774
      %v778 = vmul.f32 %v777, 0.6931472
      %v779 = vadd.f32 %v763, %v776
      %v780 = vadd.f32 %v764, %v778
      %v781 = vstv %s93
      %v782 = vmul.f32 %v779, %v781
      %v783 = vmul.f32 %v780, %v781
      %v784 = vadd.f32 %v755, %v782
      %v785 = vadd.f32 %v756, %v783
      %v786 = vstv %s62
      %v787 = vmul.f32 %v363, %v786
      %v788 = vmul.f32 %v364, %v786
      %v789 = vstv %s78
      %v790 = vadd.f32 %v787, %v789
      %v791 = vadd.f32 %v788, %v789
      %v792 = vmax.f32 %v790, 0.0
      %v793 = vmax.f32 %v791, 0.0
      %v794 = vsub.f32 0.0, %v790
      %v795 = vsub.f32 0.0, %v791
      %v796 = vmin.f32 %v790, %v794
      %v797 = vmin.f32 %v791, %v795
      %v798 = vmul.f32 %v796, 1.442695
      %v799 = vpow.pop %v798
      %v800 = vmul.f32 %v797, 1.442695
      %v801 = vpow.pop %v800
      %v802 = vadd.f32 %v799, 1.0
      %v803 = vadd.f32 %v801, 1.0
      %v804 = vlog2.pop %v802
      %v805 = vmul.f32 %v804, 0.6931472
      %v806 = vlog2.pop %v803
      %v807 = vmul.f32 %v806, 0.6931472
      %v808 = vadd.f32 %v792, %v805
      %v809 = vadd.f32 %v793, %v807
      %v810 = vstv %s94
      %v811 = vmul.f32 %v808, %v810
      %v812 = vmul.f32 %v809, %v810
      %v813 = vadd.f32 %v784, %v811
      %v814 = vadd.f32 %v785, %v812
      %v815 = vstv %s63
      %v816 = vmul.f32 %v363, %v815
      %v817 = vmul.f32 %v364, %v815
      %v818 = vstv %s79
      %v819 = vadd.f32 %v816, %v818
      %v820 = vadd.f32 %v817, %v818
      %v821 = vmax.f32 %v819, 0.0
      %v822 = vmax.f32 %v820, 0.0
      %v823 = vsub.f32 0.0, %v819
      %v824 = vsub.f32 0.0, %v820
      %v825 = vmin.f32 %v819, %v823
      %v826 = vmin.f32 %v820, %v824
      %v827 = vmul.f32 %v825, 1.442695
      %v828 = vpow.pop %v827
      %v829 = vmul.f32 %v826, 1.442695
      %v830 = vpow.pop %v829
      %v831 = vadd.f32 %v828, 1.0
      %v832 = vadd.f32 %v830, 1.0
      %v833 = vlog2.pop %v831
      %v834 = vmul.f32 %v833, 0.6931472
      %v835 = vlog2.pop %v832
      %v836 = vmul.f32 %v835, 0.6931472
      %v837 = vadd.f32 %v821, %v834
      %v838 = vadd.f32 %v822, %v836
      %v839 = vstv %s95
      %v840 = vmul.f32 %v837, %v839
      %v841 = vmul.f32 %v838, %v839
      %v842 = vadd.f32 %v813, %v840
      %v843 = vadd.f32 %v814, %v841
      %v844 = vstv %s64
      %v845 = vmul.f32 %v363, %v844
      %v846 = vmul.f32 %v364, %v844
      %v847 = vstv %s80
      %v848 = vadd.f32 %v845, %v847
      %v849 = vadd.f32 %v846, %v847
      %v850 = vmax.f32 %v848, 0.0
      %v851 = vmax.f32 %v849, 0.0
      %v852 = vsub.f32 0.0, %v848
      %v853 = vsub.f32 0.0, %v849
      %v854 = vmin.f32 %v848, %v852
      %v855 = vmin.f32 %v849, %v853
      %v856 = vmul.f32 %v854, 1.442695
      %v857 = vpow.pop %v856
      %v858 = vmul.f32 %v855, 1.442695
      %v859 = vpow.pop %v858
      %v860 = vadd.f32 %v857, 1.0
      %v861 = vadd.f32 %v859, 1.0
      %v862 = vlog2.pop %v860
      %v863 = vmul.f32 %v862, 0.6931472
      %v864 = vlog2.pop %v861
      %v865 = vmul.f32 %v864, 0.6931472
      %v866 = vadd.f32 %v850, %v863
      %v867 = vadd.f32 %v851, %v865
      %v868 = vstv %s96
      %v869 = vmul.f32 %v866, %v868
      %v870 = vmul.f32 %v867, %v868
      %v871 = vadd.f32 %v842, %v869
      %v872 = vadd.f32 %v843, %v870
      %873 = vst [vmem:[#allocation8] sm:$0xff] %v871
      %874 = vst [vmem:[#allocation8 + $0x8] sm:$0xff] %v872
    $region29: #{tpu_custom_call.1} parent=1 // pred_fallthru
      _
    // Predicated region
    $region30: #{tpu_custom_call.1} parent=1 // pred_check
      _
    $region31: #{tpu_custom_call.1} parent=1 // pred_check_branch
      %876 = sbr.rel (0) target = $region33
    $region32: #{tpu_custom_call.1} parent=1 // pred_region
      %s878 = ssub.s32 256, 256
      %879 = vsyncadd [#allocation5], %s878
      %s880 = sshll.u32 [#allocation8], 4
      %s881 = int_to_ptr.vmem [resolvable:$true] %s880
      %886 = dma.vmem_to_hbm [thread:$0]  %s881, 256, %s3, [#allocation5], 128, 128, 8
    $region33: #{tpu_custom_call.1} parent=1 // pred_fallthru
      _
    // Predicated region
    $region34: #{tpu_custom_call.1} parent=1 // pred_check
      _
    $region35: #{tpu_custom_call.1} parent=1 // pred_check_branch
      %888 = sbr.rel (0) target = $region37
    $region36: #{tpu_custom_call.1} parent=1 // pred_region
      %889 = dma.done [#allocation5], 256
    $region37: #{tpu_custom_call.1} parent=1 // pred_fallthru
      _
    %890 = vsyncpa [#allocation4], 1
    %891 = vsyncpa [#allocation5], 1
    %892 = vsyncpa [#allocation6], 1

</llo_original>
